<compile_context>
chip_gen: v7x
topology: tpu7x:2x2x1
jax: 0.10.0
libtpu: 0.0.40
codegen_flags: <defaults>
</compile_context>

<pallas_src>
import jax
import jax.numpy as jnp
from jax.experimental import pallas as pl
from jax.experimental.pallas import tpu as pltpu

INF = 100000.0   # matches SOCOLA.INF sentinel


def _round_up(x, m):
    return ((x + m - 1) // m) * m


def _vmem_bytes():
    try:
        return int(pltpu.get_tpu_info().vmem_capacity_bytes)
    except Exception:
        return 128 << 20   # assume v5e/v6e-class VMEM if the query fails


def _compiler_params(dimension_semantics):
    kwargs = {"dimension_semantics": dimension_semantics}
    try:
        cap = pltpu.get_tpu_info().vmem_capacity_bytes
        kwargs["vmem_limit_bytes"] = int(cap * 3 // 4)
    except Exception:
        pass   # fall back to the default scoped VMEM limit
    return pltpu.CompilerParams(**kwargs)


def _pick_tile(total, cap):
    """Largest multiple of 128 that divides `total` and is <= cap."""
    best, t = 128, 128
    while t <= min(total, cap):
        if total % t == 0:
            best = t
        t += 128
    return best


# ---------------------------------------------------------------------------
# Encoder kernel: in-kernel global average pool -> Linear -> ReLU -> Linear
# -> L2 normalize.  Synthetic deterministic encoder: base_encoder / projector
# MLPs are abstract (NotImplementedError) in the PyTorch module, so a concrete
# pooled MLP is used.
# ---------------------------------------------------------------------------
def encoder_kernel(x_ref, w1_ref, w2_ref, out_ref):
    # x_ref: (tile_n, C, H*W) bf16.  Pool over the spatial axis in f32 (VPU/XLU),
    # so the first matmul has K = C instead of K = C*H*W (no repeated weight).
    pooled = jnp.mean(x_ref[...].astype(jnp.float32), axis=-1)          # (tile_n, C)
    h = jnp.dot(pooled.astype(jnp.bfloat16), w1_ref[...],
                preferred_element_type=jnp.float32)                     # (tile_n, mlp)
    h = jnp.maximum(h, 0.0)                                             # ReLU (f32)
    e = jnp.dot(h.astype(jnp.bfloat16), w2_ref[...],
                preferred_element_type=jnp.float32)                     # (tile_n, dim)
    # F.normalize(e, dim=1)
    norm = jnp.sqrt(jnp.sum(e * e, axis=-1, keepdims=True))
    out_ref[...] = (e / jnp.maximum(norm, 1e-12)).astype(out_ref.dtype)


def encode(x_rows, w1, w2, tile_n=128):
    """x_rows: [Np, C, H*W] bf16 (zero-padded rows allowed) -> [Np, dim] bf16."""
    n_rows, c, hw = x_rows.shape
    mlp_dim = w1.shape[1]
    dim = w2.shape[1]
    assert n_rows % tile_n == 0
    return pl.pallas_call(
        encoder_kernel,
        grid=(n_rows // tile_n,),
        out_shape=jax.ShapeDtypeStruct((n_rows, dim), jnp.bfloat16),
        in_specs=[
            pl.BlockSpec((tile_n, c, hw), lambda i: (i, 0, 0)),
            # Constant-index weights: single-buffer (never re-fetched).
            pl.BlockSpec((c, mlp_dim), lambda i: (0, 0),
                         pipeline_mode=pl.Buffered(1)),
            pl.BlockSpec((mlp_dim, dim), lambda i: (0, 0),
                         pipeline_mode=pl.Buffered(1)),
        ],
        out_specs=pl.BlockSpec((tile_n, dim), lambda i: (i, 0)),
        compiler_params=_compiler_params(("parallel",)),
    )(x_rows, w1, w2)


# ---------------------------------------------------------------------------
# SOCOLA similarity + cross-entropy kernel (column-tiled online softmax).
# Grid: (query tiles [parallel], key tiles [arbitrary]).  Per step:
#   sim = (q / T) @ k.T  for one (tile_q, tile_k) block (bf16 MXU, f32 acc)
#   fused mask: sim[i, false_label[i]] = -INF ; padded key columns = -INF
#   stream sim block to HBM (bf16 by default); update m/l/target scratch
#   last key step: per-row CE loss = m + log(l) - target_logit
# ---------------------------------------------------------------------------
def socola_loss_kernel(t_ref, n_ref, q_ref, k_ref, false_ref, true_ref,
                       sim_ref, loss_ref, m_sc, l_sc, tgt_sc):
    ki = pl.program_id(1)
    nk = pl.num_programs(1)

    @pl.when(ki == 0)
    def _():
        m_sc[...] = jnp.full_like(m_sc, -jnp.inf)
        l_sc[...] = jnp.zeros_like(l_sc)
        tgt_sc[...] = jnp.zeros_like(tgt_sc)

    t = jnp.clip(t_ref[0, 0], 0.001, 1.0)          # self.T.clamp_(0.001, 1)
    inv_t = 1.0 / t
    n_valid = n_ref[0, 0]                          # number of real (unpadded) rows

    # Fold 1/T into the small [tile_q, dim] query tile; bf16 operands, f32 acc.
    q = (q_ref[...].astype(jnp.float32) * inv_t).astype(jnp.bfloat16)
    sim = jnp.einsum("qd,kd->qk", q, k_ref[...],
                     preferred_element_type=jnp.float32)      # [tile_q, tile_k] f32

    tile_q, tile_k = sim.shape
    col = jax.lax.broadcasted_iota(jnp.int32, (tile_q, tile_k), 1) + ki * tile_k
    neg = jnp.float32(-INF)
    # Fused mask: self (false-label) column and padded key columns in one select.
    sim = jnp.where((col == false_ref[...]) | (col >= n_valid), neg, sim)
    sim_ref[...] = sim.astype(sim_ref.dtype)       # bf16 store halves HBM writeback

    # Online softmax / cross-entropy accumulation (all f32).
    m_prev = m_sc[...]
    m_new = jnp.maximum(m_prev, jnp.max(sim, axis=-1, keepdims=True))
    alpha = jnp.exp(m_prev - m_new)
    l_sc[...] = alpha * l_sc[...] + jnp.sum(jnp.exp(sim - m_new), axis=-1,
                                            keepdims=True)
    m_sc[...] = m_new
    tgt_sc[...] += jnp.sum(jnp.where(col == true_ref[...], sim, 0.0),
                           axis=-1, keepdims=True)

    @pl.when(ki == nk - 1)
    def _():
        # cross_entropy per row = logsumexp(sim) - sim[i, true_label[i]]
        loss_ref[...] = m_sc[...] + jnp.log(l_sc[...]) - tgt_sc[...]


def socola_sim_and_loss(q_bf16, k_bf16, false_pad, true_pad, T, n_valid,
                        tile_q, tile_k, sims_dtype):
    n2p, dim = q_bf16.shape
    assert n2p % tile_q == 0 and n2p % tile_k == 0
    num_q = n2p // tile_q
    num_k = n2p // tile_k
    t_arr = jnp.full((1, 1), T, jnp.float32)
    n_arr = jnp.full((1, 1), n_valid, jnp.int32)

    if num_k == 1:
        # Key block index never changes: single-buffer the resident keys
        # (halves key VMEM; matters on v7x's 64 MiB per-TC VMEM).
        k_spec = pl.BlockSpec((tile_k, dim), lambda qi, ki: (ki, 0),
                              pipeline_mode=pl.Buffered(1))
    else:
        k_spec = pl.BlockSpec((tile_k, dim), lambda qi, ki: (ki, 0))

    sims, row_losses = pl.pallas_call(
        socola_loss_kernel,
        grid=(num_q, num_k),
        out_shape=(
            jax.ShapeDtypeStruct((n2p, n2p), sims_dtype),
            jax.ShapeDtypeStruct((n2p, 1), jnp.float32),
        ),
        in_specs=[
            pl.BlockSpec(memory_space=pltpu.MemorySpace.SMEM),     # T scalar
            pl.BlockSpec(memory_space=pltpu.MemorySpace.SMEM),     # n_valid scalar
            pl.BlockSpec((tile_q, dim), lambda qi, ki: (qi, 0)),   # query rows (bf16)
            k_spec,                                                # key tile (bf16)
            pl.BlockSpec((tile_q, 1), lambda qi, ki: (qi, 0)),     # false labels
            pl.BlockSpec((tile_q, 1), lambda qi, ki: (qi, 0)),     # true labels
        ],
        out_specs=(
            pl.BlockSpec((tile_q, tile_k), lambda qi, ki: (qi, ki)),  # sims (lane-dense)
            pl.BlockSpec((tile_q, 1), lambda qi, ki: (qi, 0)),        # per-row CE loss
        ),
        scratch_shapes=[
            pltpu.VMEM((tile_q, 1), jnp.float32),   # running max m
            pltpu.VMEM((tile_q, 1), jnp.float32),   # running sum-exp l
            pltpu.VMEM((tile_q, 1), jnp.float32),   # target-logit accumulator
        ],
        compiler_params=_compiler_params(("parallel", "arbitrary")),
    )(t_arr, n_arr, q_bf16, k_bf16, false_pad, true_pad)
    return sims, row_losses


def socola_forward(all_query_imgs, all_key_imgs, w1, w2, T, sub_batch_size,
                   perm_key, sims_dtype=jnp.bfloat16):
    # sub_batch_size only controls chunking in the reference module; the result
    # is chunk-invariant, so the TPU tile sizes are chosen independently below.
    # NOTE: sims are returned in `sims_dtype` (bf16 by default, halving the
    # dominant HBM writeback); pass jnp.float32 for closer parity with the
    # f32 PyTorch logits (bf16 q/k rounding still applies).
    batch_size = all_query_imgs.shape[0]
    all_imgs = jnp.concatenate([all_query_imgs, all_key_imgs], axis=0)   # [2B,C,H,W]
    n2, C, H, W = all_imgs.shape
    hw = H * W

    # Pad the row count to a lane-aligned multiple of 128 (padded rows are zero
    # images -> zero embeddings; they are masked / sliced away below).
    n2p = _round_up(n2, 128)

    # Chip-dependent tiles: v7x has 64 MiB per-TC VMEM -> smaller query/key tiles.
    small_vmem = _vmem_bytes() <= (96 << 20)
    tile_q = 128 if (small_vmem or n2p % 256 != 0) else 256
    tile_k = _pick_tile(n2p, 2048 if small_vmem else 4096)

    # bf16 image rows (halves the encoder's HBM read); pooling stays f32 in-kernel.
    x_rows = all_imgs.reshape(n2, C, hw).astype(jnp.bfloat16)
    x_rows = jnp.pad(x_rows, ((0, n2p - n2), (0, 0), (0, 0)))

    # Encoder shared for query and key paths (same weights -> the no_grad key
    # pass is numerically identical to the query pass).  Output is bf16,
    # L2-normalized, and feeds the sim matmul directly.
    embeds = encode(x_rows, w1.astype(jnp.bfloat16), w2.astype(jnp.bfloat16))

    # Shuffle keys; build false (inverse perm) and true (positive-pair) labels.
    perm = jax.random.permutation(perm_key, n2)
    gather_idx = jnp.concatenate([perm, jnp.arange(n2, n2p)])   # keep zero pad rows at end
    key_shuf = embeds[gather_idx]                               # bf16 keys for the MXU

    arange = jnp.arange(n2, dtype=jnp.int32)
    false_labels = jnp.zeros((n2,), jnp.int32).at[perm].set(arange)     # inverse perm
    true_labels = jnp.concatenate([false_labels[batch_size:], false_labels[:batch_size]])

    false_pad = jnp.pad(false_labels, (0, n2p - n2)).reshape(n2p, 1)
    true_pad = jnp.pad(true_labels, (0, n2p - n2)).reshape(n2p, 1)

    sims_p, row_losses_p = socola_sim_and_loss(embeds, key_shuf, false_pad,
                                               true_pad, T, n2, tile_q, tile_k,
                                               sims_dtype)
    sims = sims_p[:n2, :n2]
    # avg_loss = sum over sub-batches of (mean CE / num_sub) == mean over all rows
    avg_loss = jnp.mean(row_losses_p[:n2, 0])
    # TODO(synk): loss.backward() / autograd and .item() host sync have no Pallas
    # forward-pass equivalent; only the forward computation is reproduced.
    return avg_loss, sims, true_labels


if __name__ == "__main__":
    key = jax.random.PRNGKey(0)
    k1, k2, k3, k4, k5 = jax.random.split(key, 5)

    # Small shapes consistent with the module's forward.
    B, C, H, W = 8, 8, 16, 16
    dim, mlp_dim, sub_batch_size = 128, 256, 8
    T = 0.07

    q_imgs = jax.random.normal(k1, (B, C, H, W), jnp.float32)
    k_imgs = jax.random.normal(k2, (B, C, H, W), jnp.float32)
    # Deterministic synthetic encoder weights (base_encoder is abstract in the spec).
    w1 = jax.random.normal(k3, (C, mlp_dim), jnp.float32) * 0.1
    w2 = jax.random.normal(k4, (mlp_dim, dim), jnp.float32) * 0.05

    avg_loss, sims, true_labels = socola_forward(q_imgs, k_imgs, w1, w2, T,
                                                 sub_batch_size, k5)
    jax.block_until_ready((avg_loss, sims, true_labels))
    assert sims.shape == (2 * B, 2 * B)
    assert true_labels.shape == (2 * B,)
    assert bool(jnp.isfinite(avg_loss))
    print("KERNEL_OK")
</pallas_src>

<mosaic_0001>
module attributes {stable_mosaic.version = 11 : i64} {
  func.func @encoder_kernel(%arg0: i32, %arg1: memref<128x8x256xbf16, #tpu.memory_space<vmem>>, %arg2: memref<8x256xbf16, #tpu.memory_space<vmem>>, %arg3: memref<256x128xbf16, #tpu.memory_space<vmem>>, %arg4: memref<128x128xbf16, #tpu.memory_space<vmem>>) attributes {dimension_semantics = [#tpu.dimension_semantics<parallel>], iteration_bounds = array<i64: 1>, scalar_prefetch = 0 : i64, scratch_operands = 0 : i64, tpu.core_type = #tpu.core_type<tc>, window_params = [{transform_indices = @transform_0, window_bounds = array<i64: 128, 8, 256>}, {pipeline_mode = #tpu.pipeline_mode<synchronous>, transform_indices = @transform_1, window_bounds = array<i64: 8, 256>}, {pipeline_mode = #tpu.pipeline_mode<synchronous>, transform_indices = @transform_2, window_bounds = array<i64: 256, 128>}, {transform_indices = @transform_3, window_bounds = array<i64: 128, 128>}]} {
    %c0 = arith.constant 0 : index
    %c0_0 = arith.constant 0 : index
    %c0_1 = arith.constant 0 : index
    %0 = vector.load %arg1[%c0, %c0_0, %c0_1] : memref<128x8x256xbf16, #tpu.memory_space<vmem>>, vector<128x8x256xbf16>
    %1 = arith.extf %0 : vector<128x8x256xbf16> to vector<128x8x256xf32>
    %cst = arith.constant dense<0.000000e+00> : vector<128x8xf32>
    %2 = vector.multi_reduction <add>, %1, %cst [2] : vector<128x8x256xf32> to vector<128x8xf32>
    %cst_2 = arith.constant 2.560000e+02 : f32
    %3 = vector.broadcast %cst_2 : f32 to vector<128x8xf32>
    %4 = arith.divf %2, %3 : vector<128x8xf32>
    %5 = arith.truncf %4 : vector<128x8xf32> to vector<128x8xbf16>
    %c0_3 = arith.constant 0 : index
    %c0_4 = arith.constant 0 : index
    %6 = vector.load %arg2[%c0_3, %c0_4] : memref<8x256xbf16, #tpu.memory_space<vmem>>, vector<8x256xbf16>
    %cst_5 = arith.constant dense<0.000000e+00> : vector<128x256xf32>
    %7 = tpu.matmul %5, %6, %cst_5 {dimension_numbers = #tpu.dot_dimension_numbers<[1], [0], [0], [1], [0, 0, 1, 1], [], []>} : vector<128x8xbf16>, vector<8x256xbf16>, vector<128x256xf32> -> vector<128x256xf32>
    %cst_6 = arith.constant 0.000000e+00 : f32
    %8 = vector.broadcast %cst_6 : f32 to vector<128x256xf32>
    %9 = arith.maximumf %7, %8 : vector<128x256xf32>
    %10 = arith.truncf %9 : vector<128x256xf32> to vector<128x256xbf16>
    %c0_7 = arith.constant 0 : index
    %c0_8 = arith.constant 0 : index
    %11 = vector.load %arg3[%c0_7, %c0_8] : memref<256x128xbf16, #tpu.memory_space<vmem>>, vector<256x128xbf16>
    %cst_9 = arith.constant dense<0.000000e+00> : vector<128x128xf32>
    %12 = tpu.matmul %10, %11, %cst_9 {dimension_numbers = #tpu.dot_dimension_numbers<[1], [0], [0], [1], [0, 0, 1, 1], [], []>} : vector<128x256xbf16>, vector<256x128xbf16>, vector<128x128xf32> -> vector<128x128xf32>
    %13 = arith.mulf %12, %12 : vector<128x128xf32>
    %cst_10 = arith.constant dense<0.000000e+00> : vector<128xf32>
    %14 = vector.multi_reduction <add>, %13, %cst_10 [1] : vector<128x128xf32> to vector<128xf32>
    %15 = vector.shape_cast %14 : vector<128xf32> to vector<128x1xf32>
    %16 = math.sqrt %15 : vector<128x1xf32>
    %cst_11 = arith.constant 9.99999996E-13 : f32
    %17 = vector.broadcast %cst_11 : f32 to vector<128x1xf32>
    %18 = arith.maximumf %16, %17 : vector<128x1xf32>
    %19 = vector.broadcast %18 : vector<128x1xf32> to vector<128x128xf32>
    %20 = arith.divf %12, %19 : vector<128x128xf32>
    %21 = arith.truncf %20 : vector<128x128xf32> to vector<128x128xbf16>
    %c0_12 = arith.constant 0 : index
    %c0_13 = arith.constant 0 : index
    %22 = vector.load %arg4[%c0_12, %c0_13] : memref<128x128xbf16, #tpu.memory_space<vmem>>, vector<128x128xbf16>
    tpu.vector_store %arg4[%c0_12, %c0_13], %21 {strides = array<i32>} : memref<128x128xbf16, #tpu.memory_space<vmem>>, vector<128x128xbf16>,
    return
  }
  func.func @transform_0(%arg0: i32) -> (i32, i32, i32) {
    %c0_i32 = arith.constant 0 : i32
    %c0_i32_0 = arith.constant 0 : i32
    %c0_i32_1 = arith.constant 0 : i32
    return %arg0, %c0_i32, %c0_i32_0 : i32, i32, i32
  }
  func.func @transform_1(%arg0: i32) -> (i32, i32) {
    %c0_i32 = arith.constant 0 : i32
    %c0_i32_0 = arith.constant 0 : i32
    %c0_i32_1 = arith.constant 0 : i32
    return %c0_i32, %c0_i32_0 : i32, i32
  }
  func.func @transform_2(%arg0: i32) -> (i32, i32) {
    %c0_i32 = arith.constant 0 : i32
    %c0_i32_0 = arith.constant 0 : i32
    %c0_i32_1 = arith.constant 0 : i32
    return %c0_i32, %c0_i32_0 : i32, i32
  }
  func.func @transform_3(%arg0: i32) -> (i32, i32) {
    %c0_i32 = arith.constant 0 : i32
    %c0_i32_0 = arith.constant 0 : i32
    return %arg0, %c0_i32 : i32, i32
  }
}

</mosaic_0001>

<llo_original>
// kernel: tpu_custom_call.1
$region0: #{tpu_custom_call.1}
  #allocation0 [shape = 'u32[]', space=smem, size = 0x4, offset = 0x4, fixed_abs, tag = 'smem constant byte address 0x4 - core index']
  #allocation1 [shape = 'u32[144,128]{1,0:T(1,128)}', space=vmem, size = 0x12000, scoped, tag = 'internal scratch']
  %s0 = inlined_call_operand.hbm [shape: bf16[128,8,256], index: 0, kind: input, shape index: {}]
  %s1 = inlined_call_operand.hbm [shape: bf16[8,256], index: 1, kind: input, shape index: {}]
  %s2 = inlined_call_operand.hbm [shape: bf16[256,128], index: 2, kind: input, shape index: {}]
  %s3 = inlined_call_operand.hbm [shape: bf16[128,128], index: 3, kind: output, shape index: {}]
  %s4 = sld [smem:[#allocation0]]
  $region34: #{tpu_custom_call.1} parent=0
    _
  %s6 = ssub.s32 1, %s4
  %s7 = scalar_select 0, %s6, %s4
  $region1: #{tpu_custom_call.1} parent=0
    #allocation2 [shape = 'u8[524288]{0}', space=vmem, size = 0x80000, scoped, tag = 'input window, operand 0, single buffered']
    #allocation3 [shape = 's32[1]{0}', space=sflag, size = 0x4, scoped, tag = 'scoped memory for tpu_custom_call.1']
    #allocation4 [shape = 's32[1]{0}', space=sflag, size = 0x4, scoped, tag = 'scoped memory for tpu_custom_call.1']
    #allocation5 [shape = 'u8[4096]{0}', space=vmem, size = 0x1000, scoped, tag = 'input window, operand 1, single buffered']
    #allocation6 [shape = 's32[1]{0}', space=sflag, size = 0x4, scoped, tag = 'scoped memory for tpu_custom_call.1']
    #allocation7 [shape = 'u8[65536]{0}', space=vmem, size = 0x10000, scoped, tag = 'input window, operand 2, single buffered']
    #allocation8 [shape = 'u8[32768]{0}', space=vmem, size = 0x8000, scoped, tag = 'output window, operand 0, single buffered']
    %8 = vsyncpa [#allocation3], 0
    %9 = vsyncpa [#allocation6], 0
    %10 = vsyncpa [#allocation4], 0
    // Predicated region
    $region2: #{tpu_custom_call.1} parent=1 // pred_check
      _
    $region3: #{tpu_custom_call.1} parent=1 // pred_check_branch
      %12 = sbr.rel (0) target = $region5
    $region4: #{tpu_custom_call.1} parent=1 // pred_region
      %s14 = ssub.s32 16384, 16384
      %15 = vsyncadd [#allocation3], %s14
      %s16 = sshll.u32 [#allocation2], 4
      %s17 = int_to_ptr.vmem [resolvable:$true] %s16
      %22 = dma.hbm_to_vmem [thread:$0]  %s0, 16384, %s17, [#allocation3], 128, 128, 8
    $region5: #{tpu_custom_call.1} parent=1 // pred_fallthru
      _
    // Predicated region
    $region6: #{tpu_custom_call.1} parent=1 // pred_check
      _
    $region7: #{tpu_custom_call.1} parent=1 // pred_check_branch
      %24 = sbr.rel (0) target = $region9
    $region8: #{tpu_custom_call.1} parent=1 // pred_region
      %s26 = ssub.s32 128, 128
      %27 = vsyncadd [#allocation6], %s26
      %s29 = sshll.u32 [#allocation5], 4
      %s30 = int_to_ptr.vmem [resolvable:$true] %s29
      %32 = dma.hbm_to_vmem [thread:$0]  %s1, 128, %s30, [#allocation6]
    $region9: #{tpu_custom_call.1} parent=1 // pred_fallthru
      _
    // Predicated region
    $region10: #{tpu_custom_call.1} parent=1 // pred_check
      _
    $region11: #{tpu_custom_call.1} parent=1 // pred_check_branch
      %34 = sbr.rel (0) target = $region13
    $region12: #{tpu_custom_call.1} parent=1 // pred_region
      %s36 = ssub.s32 2048, 2048
      %37 = vsyncadd [#allocation6], %s36
      %s38 = sshll.u32 [#allocation7], 4
      %s39 = int_to_ptr.vmem [resolvable:$true] %s38
      %44 = dma.hbm_to_vmem [thread:$0]  %s2, 2048, %s39, [#allocation6], 64, 64, 4
    $region13: #{tpu_custom_call.1} parent=1 // pred_fallthru
      _
    // Predicated region
    $region14: #{tpu_custom_call.1} parent=1 // pred_check
      _
    $region15: #{tpu_custom_call.1} parent=1 // pred_check_branch
      %46 = sbr.rel (0) target = $region17
    $region16: #{tpu_custom_call.1} parent=1 // pred_region
      %47 = dma.done [#allocation3], 16384
    $region17: #{tpu_custom_call.1} parent=1 // pred_fallthru
      _
    // Predicated region
    $region18: #{tpu_custom_call.1} parent=1 // pred_check
      _
    $region19: #{tpu_custom_call.1} parent=1 // pred_check_branch
      %49 = sbr.rel (0) target = $region21
    $region20: #{tpu_custom_call.1} parent=1 // pred_region
      %50 = dma.done [#allocation6], 128
    $region21: #{tpu_custom_call.1} parent=1 // pred_fallthru
      _
    // Predicated region
    $region22: #{tpu_custom_call.1} parent=1 // pred_check
      _
    $region23: #{tpu_custom_call.1} parent=1 // pred_check_branch
      %52 = sbr.rel (0) target = $region25
    $region24: #{tpu_custom_call.1} parent=1 // pred_region
      %53 = dma.done [#allocation6], 2048
    $region25: #{tpu_custom_call.1} parent=1 // pred_fallthru
      _
    %v55 = vld [vmem:[#allocation2] sm:$0xff]
    %v56 = vld [vmem:[#allocation2 + $0x8] sm:$0xff]
    %v57 = vld [vmem:[#allocation2 + $0x10] sm:$0xff]
    %v58 = vld [vmem:[#allocation2 + $0x18] sm:$0xff]
    %v59 = vld [vmem:[#allocation2 + $0x20] sm:$0xff]
    %v60 = vld [vmem:[#allocation2 + $0x28] sm:$0xff]
    %v61 = vld [vmem:[#allocation2 + $0x30] sm:$0xff]
    %v62 = vld [vmem:[#allocation2 + $0x38] sm:$0xff]
    %v63 = vld [vmem:[#allocation2 + $0x40] sm:$0xff]
    %v64 = vld [vmem:[#allocation2 + $0x48] sm:$0xff]
    %v65 = vld [vmem:[#allocation2 + $0x50] sm:$0xff]
    %v66 = vld [vmem:[#allocation2 + $0x58] sm:$0xff]
    %v67 = vld [vmem:[#allocation2 + $0x60] sm:$0xff]
    %v68 = vld [vmem:[#allocation2 + $0x68] sm:$0xff]
    %v69 = vld [vmem:[#allocation2 + $0x70] sm:$0xff]
    %v70 = vld [vmem:[#allocation2 + $0x78] sm:$0xff]
    %v71 = vld [vmem:[#allocation2 + $0x80] sm:$0xff]
    %v72 = vld [vmem:[#allocation2 + $0x88] sm:$0xff]
    %v73 = vld [vmem:[#allocation2 + $0x90] sm:$0xff]
    %v74 = vld [vmem:[#allocation2 + $0x98] sm:$0xff]
    %v75 = vld [vmem:[#allocation2 + $0xa0] sm:$0xff]
    %v76 = vld [vmem:[#allocation2 + $0xa8] sm:$0xff]
    %v77 = vld [vmem:[#allocation2 + $0xb0] sm:$0xff]
    %v78 = vld [vmem:[#allocation2 + $0xb8] sm:$0xff]
    %v79 = vld [vmem:[#allocation2 + $0xc0] sm:$0xff]
    %v80 = vld [vmem:[#allocation2 + $0xc8] sm:$0xff]
    %v81 = vld [vmem:[#allocation2 + $0xd0] sm:$0xff]
    %v82 = vld [vmem:[#allocation2 + $0xd8] sm:$0xff]
    %v83 = vld [vmem:[#allocation2 + $0xe0] sm:$0xff]
    %v84 = vld [vmem:[#allocation2 + $0xe8] sm:$0xff]
    %v85 = vld [vmem:[#allocation2 + $0xf0] sm:$0xff]
    %v86 = vld [vmem:[#allocation2 + $0xf8] sm:$0xff]
    %v87 = vld [vmem:[#allocation2 + $0x100] sm:$0xff]
    %v88 = vld [vmem:[#allocation2 + $0x108] sm:$0xff]
    %v89 = vld [vmem:[#allocation2 + $0x110] sm:$0xff]
    %v90 = vld [vmem:[#allocation2 + $0x118] sm:$0xff]
    %v91 = vld [vmem:[#allocation2 + $0x120] sm:$0xff]
    %v92 = vld [vmem:[#allocation2 + $0x128] sm:$0xff]
    %v93 = vld [vmem:[#allocation2 + $0x130] sm:$0xff]
    %v94 = vld [vmem:[#allocation2 + $0x138] sm:$0xff]
    %v95 = vld [vmem:[#allocation2 + $0x140] sm:$0xff]
    %v96 = vld [vmem:[#allocation2 + $0x148] sm:$0xff]
    %v97 = vld [vmem:[#allocation2 + $0x150] sm:$0xff]
    %v98 = vld [vmem:[#allocation2 + $0x158] sm:$0xff]
    %v99 = vld [vmem:[#allocation2 + $0x160] sm:$0xff]
    %v100 = vld [vmem:[#allocation2 + $0x168] sm:$0xff]
    %v101 = vld [vmem:[#allocation2 + $0x170] sm:$0xff]
    %v102 = vld [vmem:[#allocation2 + $0x178] sm:$0xff]
    %v103 = vld [vmem:[#allocation2 + $0x180] sm:$0xff]
    %v104 = vld [vmem:[#allocation2 + $0x188] sm:$0xff]
    %v105 = vld [vmem:[#allocation2 + $0x190] sm:$0xff]
    %v106 = vld [vmem:[#allocation2 + $0x198] sm:$0xff]
    %v107 = vld [vmem:[#allocation2 + $0x1a0] sm:$0xff]
    %v108 = vld [vmem:[#allocation2 + $0x1a8] sm:$0xff]
    %v109 = vld [vmem:[#allocation2 + $0x1b0] sm:$0xff]
    %v110 = vld [vmem:[#allocation2 + $0x1b8] sm:$0xff]
    %v111 = vld [vmem:[#allocation2 + $0x1c0] sm:$0xff]
    %v112 = vld [vmem:[#allocation2 + $0x1c8] sm:$0xff]
    %v113 = vld [vmem:[#allocation2 + $0x1d0] sm:$0xff]
    %v114 = vld [vmem:[#allocation2 + $0x1d8] sm:$0xff]
    %v115 = vld [vmem:[#allocation2 + $0x1e0] sm:$0xff]
    %v116 = vld [vmem:[#allocation2 + $0x1e8] sm:$0xff]
    %v117 = vld [vmem:[#allocation2 + $0x1f0] sm:$0xff]
    %v118 = vld [vmem:[#allocation2 + $0x1f8] sm:$0xff]
    %v119 = vld [vmem:[#allocation2 + $0x200] sm:$0xff]
    %v120 = vld [vmem:[#allocation2 + $0x208] sm:$0xff]
    %v121 = vld [vmem:[#allocation2 + $0x210] sm:$0xff]
    %v122 = vld [vmem:[#allocation2 + $0x218] sm:$0xff]
    %v123 = vld [vmem:[#allocation2 + $0x220] sm:$0xff]
    %v124 = vld [vmem:[#allocation2 + $0x228] sm:$0xff]
    %v125 = vld [vmem:[#allocation2 + $0x230] sm:$0xff]
    %v126 = vld [vmem:[#allocation2 + $0x238] sm:$0xff]
    %v127 = vld [vmem:[#allocation2 + $0x240] sm:$0xff]
    %v128 = vld [vmem:[#allocation2 + $0x248] sm:$0xff]
    %v129 = vld [vmem:[#allocation2 + $0x250] sm:$0xff]
    %v130 = vld [vmem:[#allocation2 + $0x258] sm:$0xff]
    %v131 = vld [vmem:[#allocation2 + $0x260] sm:$0xff]
    %v132 = vld [vmem:[#allocation2 + $0x268] sm:$0xff]
    %v133 = vld [vmem:[#allocation2 + $0x270] sm:$0xff]
    %v134 = vld [vmem:[#allocation2 + $0x278] sm:$0xff]
    %v135 = vld [vmem:[#allocation2 + $0x280] sm:$0xff]
    %v136 = vld [vmem:[#allocation2 + $0x288] sm:$0xff]
    %v137 = vld [vmem:[#allocation2 + $0x290] sm:$0xff]
    %v138 = vld [vmem:[#allocation2 + $0x298] sm:$0xff]
    %v139 = vld [vmem:[#allocation2 + $0x2a0] sm:$0xff]
    %v140 = vld [vmem:[#allocation2 + $0x2a8] sm:$0xff]
    %v141 = vld [vmem:[#allocation2 + $0x2b0] sm:$0xff]
    %v142 = vld [vmem:[#allocation2 + $0x2b8] sm:$0xff]
    %v143 = vld [vmem:[#allocation2 + $0x2c0] sm:$0xff]
    %v144 = vld [vmem:[#allocation2 + $0x2c8] sm:$0xff]
    %v145 = vld [vmem:[#allocation2 + $0x2d0] sm:$0xff]
    %v146 = vld [vmem:[#allocation2 + $0x2d8] sm:$0xff]
    %v147 = vld [vmem:[#allocation2 + $0x2e0] sm:$0xff]
    %v148 = vld [vmem:[#allocation2 + $0x2e8] sm:$0xff]
    %v149 = vld [vmem:[#allocation2 + $0x2f0] sm:$0xff]
    %v150 = vld [vmem:[#allocation2 + $0x2f8] sm:$0xff]
    %v151 = vld [vmem:[#allocation2 + $0x300] sm:$0xff]
    %v152 = vld [vmem:[#allocation2 + $0x308] sm:$0xff]
    %v153 = vld [vmem:[#allocation2 + $0x310] sm:$0xff]
    %v154 = vld [vmem:[#allocation2 + $0x318] sm:$0xff]
    %v155 = vld [vmem:[#allocation2 + $0x320] sm:$0xff]
    %v156 = vld [vmem:[#allocation2 + $0x328] sm:$0xff]
    %v157 = vld [vmem:[#allocation2 + $0x330] sm:$0xff]
    %v158 = vld [vmem:[#allocation2 + $0x338] sm:$0xff]
    %v159 = vld [vmem:[#allocation2 + $0x340] sm:$0xff]
    %v160 = vld [vmem:[#allocation2 + $0x348] sm:$0xff]
    %v161 = vld [vmem:[#allocation2 + $0x350] sm:$0xff]
    %v162 = vld [vmem:[#allocation2 + $0x358] sm:$0xff]
    %v163 = vld [vmem:[#allocation2 + $0x360] sm:$0xff]
    %v164 = vld [vmem:[#allocation2 + $0x368] sm:$0xff]
    %v165 = vld [vmem:[#allocation2 + $0x370] sm:$0xff]
    %v166 = vld [vmem:[#allocation2 + $0x378] sm:$0xff]
    %v167 = vld [vmem:[#allocation2 + $0x380] sm:$0xff]
    %v168 = vld [vmem:[#allocation2 + $0x388] sm:$0xff]
    %v169 = vld [vmem:[#allocation2 + $0x390] sm:$0xff]
    %v170 = vld [vmem:[#allocation2 + $0x398] sm:$0xff]
    %v171 = vld [vmem:[#allocation2 + $0x3a0] sm:$0xff]
    %v172 = vld [vmem:[#allocation2 + $0x3a8] sm:$0xff]
    %v173 = vld [vmem:[#allocation2 + $0x3b0] sm:$0xff]
    %v174 = vld [vmem:[#allocation2 + $0x3b8] sm:$0xff]
    %v175 = vld [vmem:[#allocation2 + $0x3c0] sm:$0xff]
    %v176 = vld [vmem:[#allocation2 + $0x3c8] sm:$0xff]
    %v177 = vld [vmem:[#allocation2 + $0x3d0] sm:$0xff]
    %v178 = vld [vmem:[#allocation2 + $0x3d8] sm:$0xff]
    %v179 = vld [vmem:[#allocation2 + $0x3e0] sm:$0xff]
    %v180 = vld [vmem:[#allocation2 + $0x3e8] sm:$0xff]
    %v181 = vld [vmem:[#allocation2 + $0x3f0] sm:$0xff]
    %v182 = vld [vmem:[#allocation2 + $0x3f8] sm:$0xff]
    %v183 = vunpack.c.l.bf16 %v55
    %v184 = vunpack.c.h.bf16 %v55
    %v185 = vunpack.c.l.bf16 %v56
    %v186 = vunpack.c.h.bf16 %v56
    %v187 = vunpack.c.l.bf16 %v57
    %v188 = vunpack.c.h.bf16 %v57
    %v189 = vunpack.c.l.bf16 %v58
    %v190 = vunpack.c.h.bf16 %v58
    %v191 = vunpack.c.l.bf16 %v59
    %v192 = vunpack.c.h.bf16 %v59
    %v193 = vunpack.c.l.bf16 %v60
    %v194 = vunpack.c.h.bf16 %v60
    %v195 = vunpack.c.l.bf16 %v61
    %v196 = vunpack.c.h.bf16 %v61
    %v197 = vunpack.c.l.bf16 %v62
    %v198 = vunpack.c.h.bf16 %v62
    %v199 = vunpack.c.l.bf16 %v63
    %v200 = vunpack.c.h.bf16 %v63
    %v201 = vunpack.c.l.bf16 %v64
    %v202 = vunpack.c.h.bf16 %v64
    %v203 = vunpack.c.l.bf16 %v65
    %v204 = vunpack.c.h.bf16 %v65
    %v205 = vunpack.c.l.bf16 %v66
    %v206 = vunpack.c.h.bf16 %v66
    %v207 = vunpack.c.l.bf16 %v67
    %v208 = vunpack.c.h.bf16 %v67
    %v209 = vunpack.c.l.bf16 %v68
    %v210 = vunpack.c.h.bf16 %v68
    %v211 = vunpack.c.l.bf16 %v69
    %v212 = vunpack.c.h.bf16 %v69
    %v213 = vunpack.c.l.bf16 %v70
    %v214 = vunpack.c.h.bf16 %v70
    %v215 = vunpack.c.l.bf16 %v71
    %v216 = vunpack.c.h.bf16 %v71
    %v217 = vunpack.c.l.bf16 %v72
    %v218 = vunpack.c.h.bf16 %v72
    %v219 = vunpack.c.l.bf16 %v73
    %v220 = vunpack.c.h.bf16 %v73
    %v221 = vunpack.c.l.bf16 %v74
    %v222 = vunpack.c.h.bf16 %v74
    %v223 = vunpack.c.l.bf16 %v75
    %v224 = vunpack.c.h.bf16 %v75
    %v225 = vunpack.c.l.bf16 %v76
    %v226 = vunpack.c.h.bf16 %v76
    %v227 = vunpack.c.l.bf16 %v77
    %v228 = vunpack.c.h.bf16 %v77
    %v229 = vunpack.c.l.bf16 %v78
    %v230 = vunpack.c.h.bf16 %v78
    %v231 = vunpack.c.l.bf16 %v79
    %v232 = vunpack.c.h.bf16 %v79
    %v233 = vunpack.c.l.bf16 %v80
    %v234 = vunpack.c.h.bf16 %v80
    %v235 = vunpack.c.l.bf16 %v81
    %v236 = vunpack.c.h.bf16 %v81
    %v237 = vunpack.c.l.bf16 %v82
    %v238 = vunpack.c.h.bf16 %v82
    %v239 = vunpack.c.l.bf16 %v83
    %v240 = vunpack.c.h.bf16 %v83
    %v241 = vunpack.c.l.bf16 %v84
    %v242 = vunpack.c.h.bf16 %v84
    %v243 = vunpack.c.l.bf16 %v85
    %v244 = vunpack.c.h.bf16 %v85
    %v245 = vunpack.c.l.bf16 %v86
    %v246 = vunpack.c.h.bf16 %v86
    %v247 = vunpack.c.l.bf16 %v87
    %v248 = vunpack.c.h.bf16 %v87
    %v249 = vunpack.c.l.bf16 %v88
    %v250 = vunpack.c.h.bf16 %v88
    %v251 = vunpack.c.l.bf16 %v89
    %v252 = vunpack.c.h.bf16 %v89
    %v253 = vunpack.c.l.bf16 %v90
    %v254 = vunpack.c.h.bf16 %v90
    %v255 = vunpack.c.l.bf16 %v91
    %v256 = vunpack.c.h.bf16 %v91
    %v257 = vunpack.c.l.bf16 %v92
    %v258 = vunpack.c.h.bf16 %v92
    %v259 = vunpack.c.l.bf16 %v93
    %v260 = vunpack.c.h.bf16 %v93
    %v261 = vunpack.c.l.bf16 %v94
    %v262 = vunpack.c.h.bf16 %v94
    %v263 = vunpack.c.l.bf16 %v95
    %v264 = vunpack.c.h.bf16 %v95
    %v265 = vunpack.c.l.bf16 %v96
    %v266 = vunpack.c.h.bf16 %v96
    %v267 = vunpack.c.l.bf16 %v97
    %v268 = vunpack.c.h.bf16 %v97
    %v269 = vunpack.c.l.bf16 %v98
    %v270 = vunpack.c.h.bf16 %v98
    %v271 = vunpack.c.l.bf16 %v99
    %v272 = vunpack.c.h.bf16 %v99
    %v273 = vunpack.c.l.bf16 %v100
    %v274 = vunpack.c.h.bf16 %v100
    %v275 = vunpack.c.l.bf16 %v101
    %v276 = vunpack.c.h.bf16 %v101
    %v277 = vunpack.c.l.bf16 %v102
    %v278 = vunpack.c.h.bf16 %v102
    %v279 = vunpack.c.l.bf16 %v103
    %v280 = vunpack.c.h.bf16 %v103
    %v281 = vunpack.c.l.bf16 %v104
    %v282 = vunpack.c.h.bf16 %v104
    %v283 = vunpack.c.l.bf16 %v105
    %v284 = vunpack.c.h.bf16 %v105
    %v285 = vunpack.c.l.bf16 %v106
    %v286 = vunpack.c.h.bf16 %v106
    %v287 = vunpack.c.l.bf16 %v107
    %v288 = vunpack.c.h.bf16 %v107
    %v289 = vunpack.c.l.bf16 %v108
    %v290 = vunpack.c.h.bf16 %v108
    %v291 = vunpack.c.l.bf16 %v109
    %v292 = vunpack.c.h.bf16 %v109
    %v293 = vunpack.c.l.bf16 %v110
    %v294 = vunpack.c.h.bf16 %v110
    %v295 = vunpack.c.l.bf16 %v111
    %v296 = vunpack.c.h.bf16 %v111
    %v297 = vunpack.c.l.bf16 %v112
    %v298 = vunpack.c.h.bf16 %v112
    %v299 = vunpack.c.l.bf16 %v113
    %v300 = vunpack.c.h.bf16 %v113
    %v301 = vunpack.c.l.bf16 %v114
    %v302 = vunpack.c.h.bf16 %v114
    %v303 = vunpack.c.l.bf16 %v115
    %v304 = vunpack.c.h.bf16 %v115
    %v305 = vunpack.c.l.bf16 %v116
    %v306 = vunpack.c.h.bf16 %v116
    %v307 = vunpack.c.l.bf16 %v117
    %v308 = vunpack.c.h.bf16 %v117
    %v309 = vunpack.c.l.bf16 %v118
    %v310 = vunpack.c.h.bf16 %v118
    %v311 = vunpack.c.l.bf16 %v119
    %v312 = vunpack.c.h.bf16 %v119
    %v313 = vunpack.c.l.bf16 %v120
    %v314 = vunpack.c.h.bf16 %v120
    %v315 = vunpack.c.l.bf16 %v121
    %v316 = vunpack.c.h.bf16 %v121
    %v317 = vunpack.c.l.bf16 %v122
    %v318 = vunpack.c.h.bf16 %v122
    %v319 = vunpack.c.l.bf16 %v123
    %v320 = vunpack.c.h.bf16 %v123
    %v321 = vunpack.c.l.bf16 %v124
    %v322 = vunpack.c.h.bf16 %v124
    %v323 = vunpack.c.l.bf16 %v125
    %v324 = vunpack.c.h.bf16 %v125
    %v325 = vunpack.c.l.bf16 %v126
    %v326 = vunpack.c.h.bf16 %v126
    %v327 = vunpack.c.l.bf16 %v127
    %v328 = vunpack.c.h.bf16 %v127
    %v329 = vunpack.c.l.bf16 %v128
    %v330 = vunpack.c.h.bf16 %v128
    %v331 = vunpack.c.l.bf16 %v129
    %v332 = vunpack.c.h.bf16 %v129
    %v333 = vunpack.c.l.bf16 %v130
    %v334 = vunpack.c.h.bf16 %v130
    %v335 = vunpack.c.l.bf16 %v131
    %v336 = vunpack.c.h.bf16 %v131
    %v337 = vunpack.c.l.bf16 %v132
    %v338 = vunpack.c.h.bf16 %v132
    %v339 = vunpack.c.l.bf16 %v133
    %v340 = vunpack.c.h.bf16 %v133
    %v341 = vunpack.c.l.bf16 %v134
    %v342 = vunpack.c.h.bf16 %v134
    %v343 = vunpack.c.l.bf16 %v135
    %v344 = vunpack.c.h.bf16 %v135
    %v345 = vunpack.c.l.bf16 %v136
    %v346 = vunpack.c.h.bf16 %v136
    %v347 = vunpack.c.l.bf16 %v137
    %v348 = vunpack.c.h.bf16 %v137
    %v349 = vunpack.c.l.bf16 %v138
    %v350 = vunpack.c.h.bf16 %v138
    %v351 = vunpack.c.l.bf16 %v139
    %v352 = vunpack.c.h.bf16 %v139
    %v353 = vunpack.c.l.bf16 %v140
    %v354 = vunpack.c.h.bf16 %v140
    %v355 = vunpack.c.l.bf16 %v141
    %v356 = vunpack.c.h.bf16 %v141
    %v357 = vunpack.c.l.bf16 %v142
    %v358 = vunpack.c.h.bf16 %v142
    %v359 = vunpack.c.l.bf16 %v143
    %v360 = vunpack.c.h.bf16 %v143
    %v361 = vunpack.c.l.bf16 %v144
    %v362 = vunpack.c.h.bf16 %v144
    %v363 = vunpack.c.l.bf16 %v145
    %v364 = vunpack.c.h.bf16 %v145
    %v365 = vunpack.c.l.bf16 %v146
    %v366 = vunpack.c.h.bf16 %v146
    %v367 = vunpack.c.l.bf16 %v147
    %v368 = vunpack.c.h.bf16 %v147
    %v369 = vunpack.c.l.bf16 %v148
    %v370 = vunpack.c.h.bf16 %v148
    %v371 = vunpack.c.l.bf16 %v149
    %v372 = vunpack.c.h.bf16 %v149
    %v373 = vunpack.c.l.bf16 %v150
    %v374 = vunpack.c.h.bf16 %v150
    %v375 = vunpack.c.l.bf16 %v151
    %v376 = vunpack.c.h.bf16 %v151
    %v377 = vunpack.c.l.bf16 %v152
    %v378 = vunpack.c.h.bf16 %v152
    %v379 = vunpack.c.l.bf16 %v153
    %v380 = vunpack.c.h.bf16 %v153
    %v381 = vunpack.c.l.bf16 %v154
    %v382 = vunpack.c.h.bf16 %v154
    %v383 = vunpack.c.l.bf16 %v155
    %v384 = vunpack.c.h.bf16 %v155
    %v385 = vunpack.c.l.bf16 %v156
    %v386 = vunpack.c.h.bf16 %v156
    %v387 = vunpack.c.l.bf16 %v157
    %v388 = vunpack.c.h.bf16 %v157
    %v389 = vunpack.c.l.bf16 %v158
    %v390 = vunpack.c.h.bf16 %v158
    %v391 = vunpack.c.l.bf16 %v159
    %v392 = vunpack.c.h.bf16 %v159
    %v393 = vunpack.c.l.bf16 %v160
    %v394 = vunpack.c.h.bf16 %v160
    %v395 = vunpack.c.l.bf16 %v161
    %v396 = vunpack.c.h.bf16 %v161
    %v397 = vunpack.c.l.bf16 %v162
    %v398 = vunpack.c.h.bf16 %v162
    %v399 = vunpack.c.l.bf16 %v163
    %v400 = vunpack.c.h.bf16 %v163
    %v401 = vunpack.c.l.bf16 %v164
    %v402 = vunpack.c.h.bf16 %v164
    %v403 = vunpack.c.l.bf16 %v165
    %v404 = vunpack.c.h.bf16 %v165
    %v405 = vunpack.c.l.bf16 %v166
    %v406 = vunpack.c.h.bf16 %v166
    %v407 = vunpack.c.l.bf16 %v167
    %v408 = vunpack.c.h.bf16 %v167
    %v409 = vunpack.c.l.bf16 %v168
    %v410 = vunpack.c.h.bf16 %v168
    %v411 = vunpack.c.l.bf16 %v169
    %v412 = vunpack.c.h.bf16 %v169
    %v413 = vunpack.c.l.bf16 %v170
    %v414 = vunpack.c.h.bf16 %v170
    %v415 = vunpack.c.l.bf16 %v171
    %v416 = vunpack.c.h.bf16 %v171
    %v417 = vunpack.c.l.bf16 %v172
    %v418 = vunpack.c.h.bf16 %v172
    %v419 = vunpack.c.l.bf16 %v173
    %v420 = vunpack.c.h.bf16 %v173
    %v421 = vunpack.c.l.bf16 %v174
    %v422 = vunpack.c.h.bf16 %v174
    %v423 = vunpack.c.l.bf16 %v175
    %v424 = vunpack.c.h.bf16 %v175
    %v425 = vunpack.c.l.bf16 %v176
    %v426 = vunpack.c.h.bf16 %v176
    %v427 = vunpack.c.l.bf16 %v177
    %v428 = vunpack.c.h.bf16 %v177
    %v429 = vunpack.c.l.bf16 %v178
    %v430 = vunpack.c.h.bf16 %v178
    %v431 = vunpack.c.l.bf16 %v179
    %v432 = vunpack.c.h.bf16 %v179
    %v433 = vunpack.c.l.bf16 %v180
    %v434 = vunpack.c.h.bf16 %v180
    %v435 = vunpack.c.l.bf16 %v181
    %v436 = vunpack.c.h.bf16 %v181
    %v437 = vunpack.c.l.bf16 %v182
    %v438 = vunpack.c.h.bf16 %v182
    %v439 = vadd.f32 %v183, %v184
    %440 = vadd.xlane.f32.xlu0 %v439
    %v441 = vpop.xlane.xlu0 %440
    %v442 = vadd.f32 %v185, %v186
    %443 = vadd.xlane.f32.xlu0 %v442
    %v444 = vpop.xlane.xlu0 %443
    %v445 = vadd.f32 %v187, %v188
    %446 = vadd.xlane.f32.xlu0 %v445
    %v447 = vpop.xlane.xlu0 %446
    %v448 = vadd.f32 %v189, %v190
    %449 = vadd.xlane.f32.xlu0 %v448
    %v450 = vpop.xlane.xlu0 %449
    %v451 = vadd.f32 %v191, %v192
    %452 = vadd.xlane.f32.xlu0 %v451
    %v453 = vpop.xlane.xlu0 %452
    %v454 = vadd.f32 %v193, %v194
    %455 = vadd.xlane.f32.xlu0 %v454
    %v456 = vpop.xlane.xlu0 %455
    %v457 = vadd.f32 %v195, %v196
    %458 = vadd.xlane.f32.xlu0 %v457
    %v459 = vpop.xlane.xlu0 %458
    %v460 = vadd.f32 %v197, %v198
    %461 = vadd.xlane.f32.xlu0 %v460
    %v462 = vpop.xlane.xlu0 %461
    %v463 = vadd.f32 %v199, %v200
    %464 = vadd.xlane.f32.xlu0 %v463
    %v465 = vpop.xlane.xlu0 %464
    %v466 = vadd.f32 %v201, %v202
    %467 = vadd.xlane.f32.xlu0 %v466
    %v468 = vpop.xlane.xlu0 %467
    %v469 = vadd.f32 %v203, %v204
    %470 = vadd.xlane.f32.xlu0 %v469
    %v471 = vpop.xlane.xlu0 %470
    %v472 = vadd.f32 %v205, %v206
    %473 = vadd.xlane.f32.xlu0 %v472
    %v474 = vpop.xlane.xlu0 %473
    %v475 = vadd.f32 %v207, %v208
    %476 = vadd.xlane.f32.xlu0 %v475
    %v477 = vpop.xlane.xlu0 %476
    %v478 = vadd.f32 %v209, %v210
    %479 = vadd.xlane.f32.xlu0 %v478
    %v480 = vpop.xlane.xlu0 %479
    %v481 = vadd.f32 %v211, %v212
    %482 = vadd.xlane.f32.xlu0 %v481
    %v483 = vpop.xlane.xlu0 %482
    %v484 = vadd.f32 %v213, %v214
    %485 = vadd.xlane.f32.xlu0 %v484
    %v486 = vpop.xlane.xlu0 %485
    %v487 = vadd.f32 %v215, %v216
    %488 = vadd.xlane.f32.xlu0 %v487
    %v489 = vpop.xlane.xlu0 %488
    %v490 = vadd.f32 %v217, %v218
    %491 = vadd.xlane.f32.xlu0 %v490
    %v492 = vpop.xlane.xlu0 %491
    %v493 = vadd.f32 %v219, %v220
    %494 = vadd.xlane.f32.xlu0 %v493
    %v495 = vpop.xlane.xlu0 %494
    %v496 = vadd.f32 %v221, %v222
    %497 = vadd.xlane.f32.xlu0 %v496
    %v498 = vpop.xlane.xlu0 %497
    %v499 = vadd.f32 %v223, %v224
    %500 = vadd.xlane.f32.xlu0 %v499
    %v501 = vpop.xlane.xlu0 %500
    %v502 = vadd.f32 %v225, %v226
    %503 = vadd.xlane.f32.xlu0 %v502
    %v504 = vpop.xlane.xlu0 %503
    %v505 = vadd.f32 %v227, %v228
    %506 = vadd.xlane.f32.xlu0 %v505
    %v507 = vpop.xlane.xlu0 %506
    %v508 = vadd.f32 %v229, %v230
    %509 = vadd.xlane.f32.xlu0 %v508
    %v510 = vpop.xlane.xlu0 %509
    %v511 = vadd.f32 %v231, %v232
    %512 = vadd.xlane.f32.xlu0 %v511
    %v513 = vpop.xlane.xlu0 %512
    %v514 = vadd.f32 %v233, %v234
    %515 = vadd.xlane.f32.xlu0 %v514
    %v516 = vpop.xlane.xlu0 %515
    %v517 = vadd.f32 %v235, %v236
    %518 = vadd.xlane.f32.xlu0 %v517
    %v519 = vpop.xlane.xlu0 %518
    %v520 = vadd.f32 %v237, %v238
    %521 = vadd.xlane.f32.xlu0 %v520
    %v522 = vpop.xlane.xlu0 %521
    %v523 = vadd.f32 %v239, %v240
    %524 = vadd.xlane.f32.xlu0 %v523
    %v525 = vpop.xlane.xlu0 %524
    %v526 = vadd.f32 %v241, %v242
    %527 = vadd.xlane.f32.xlu0 %v526
    %v528 = vpop.xlane.xlu0 %527
    %v529 = vadd.f32 %v243, %v244
    %530 = vadd.xlane.f32.xlu0 %v529
    %v531 = vpop.xlane.xlu0 %530
    %v532 = vadd.f32 %v245, %v246
    %533 = vadd.xlane.f32.xlu0 %v532
    %v534 = vpop.xlane.xlu0 %533
    %v535 = vadd.f32 %v247, %v248
    %536 = vadd.xlane.f32.xlu0 %v535
    %v537 = vpop.xlane.xlu0 %536
    %v538 = vadd.f32 %v249, %v250
    %539 = vadd.xlane.f32.xlu0 %v538
    %v540 = vpop.xlane.xlu0 %539
    %v541 = vadd.f32 %v251, %v252
    %542 = vadd.xlane.f32.xlu0 %v541
    %v543 = vpop.xlane.xlu0 %542
    %v544 = vadd.f32 %v253, %v254
    %545 = vadd.xlane.f32.xlu0 %v544
    %v546 = vpop.xlane.xlu0 %545
    %v547 = vadd.f32 %v255, %v256
    %548 = vadd.xlane.f32.xlu0 %v547
    %v549 = vpop.xlane.xlu0 %548
    %v550 = vadd.f32 %v257, %v258
    %551 = vadd.xlane.f32.xlu0 %v550
    %v552 = vpop.xlane.xlu0 %551
    %v553 = vadd.f32 %v259, %v260
    %554 = vadd.xlane.f32.xlu0 %v553
    %v555 = vpop.xlane.xlu0 %554
    %v556 = vadd.f32 %v261, %v262
    %557 = vadd.xlane.f32.xlu0 %v556
    %v558 = vpop.xlane.xlu0 %557
    %v559 = vadd.f32 %v263, %v264
    %560 = vadd.xlane.f32.xlu0 %v559
    %v561 = vpop.xlane.xlu0 %560
    %v562 = vadd.f32 %v265, %v266
    %563 = vadd.xlane.f32.xlu0 %v562
    %v564 = vpop.xlane.xlu0 %563
    %v565 = vadd.f32 %v267, %v268
    %566 = vadd.xlane.f32.xlu0 %v565
    %v567 = vpop.xlane.xlu0 %566
    %v568 = vadd.f32 %v269, %v270
    %569 = vadd.xlane.f32.xlu0 %v568
    %v570 = vpop.xlane.xlu0 %569
    %v571 = vadd.f32 %v271, %v272
    %572 = vadd.xlane.f32.xlu0 %v571
    %v573 = vpop.xlane.xlu0 %572
    %v574 = vadd.f32 %v273, %v274
    %575 = vadd.xlane.f32.xlu0 %v574
    %v576 = vpop.xlane.xlu0 %575
    %v577 = vadd.f32 %v275, %v276
    %578 = vadd.xlane.f32.xlu0 %v577
    %v579 = vpop.xlane.xlu0 %578
    %v580 = vadd.f32 %v277, %v278
    %581 = vadd.xlane.f32.xlu0 %v580
    %v582 = vpop.xlane.xlu0 %581
    %v583 = vadd.f32 %v279, %v280
    %584 = vadd.xlane.f32.xlu0 %v583
    %v585 = vpop.xlane.xlu0 %584
    %v586 = vadd.f32 %v281, %v282
    %587 = vadd.xlane.f32.xlu0 %v586
    %v588 = vpop.xlane.xlu0 %587
    %v589 = vadd.f32 %v283, %v284
    %590 = vadd.xlane.f32.xlu0 %v589
    %v591 = vpop.xlane.xlu0 %590
    %v592 = vadd.f32 %v285, %v286
    %593 = vadd.xlane.f32.xlu0 %v592
    %v594 = vpop.xlane.xlu0 %593
    %v595 = vadd.f32 %v287, %v288
    %596 = vadd.xlane.f32.xlu0 %v595
    %v597 = vpop.xlane.xlu0 %596
    %v598 = vadd.f32 %v289, %v290
    %599 = vadd.xlane.f32.xlu0 %v598
    %v600 = vpop.xlane.xlu0 %599
    %v601 = vadd.f32 %v291, %v292
    %602 = vadd.xlane.f32.xlu0 %v601
    %v603 = vpop.xlane.xlu0 %602
    %v604 = vadd.f32 %v293, %v294
    %605 = vadd.xlane.f32.xlu0 %v604
    %v606 = vpop.xlane.xlu0 %605
    %v607 = vadd.f32 %v295, %v296
    %608 = vadd.xlane.f32.xlu0 %v607
    %v609 = vpop.xlane.xlu0 %608
    %v610 = vadd.f32 %v297, %v298
    %611 = vadd.xlane.f32.xlu0 %v610
    %v612 = vpop.xlane.xlu0 %611
    %v613 = vadd.f32 %v299, %v300
    %614 = vadd.xlane.f32.xlu0 %v613
    %v615 = vpop.xlane.xlu0 %614
    %v616 = vadd.f32 %v301, %v302
    %617 = vadd.xlane.f32.xlu0 %v616
    %v618 = vpop.xlane.xlu0 %617
    %v619 = vadd.f32 %v303, %v304
    %620 = vadd.xlane.f32.xlu0 %v619
    %v621 = vpop.xlane.xlu0 %620
    %v622 = vadd.f32 %v305, %v306
    %623 = vadd.xlane.f32.xlu0 %v622
    %v624 = vpop.xlane.xlu0 %623
    %v625 = vadd.f32 %v307, %v308
    %626 = vadd.xlane.f32.xlu0 %v625
    %v627 = vpop.xlane.xlu0 %626
    %v628 = vadd.f32 %v309, %v310
    %629 = vadd.xlane.f32.xlu0 %v628
    %v630 = vpop.xlane.xlu0 %629
    %v631 = vadd.f32 %v311, %v312
    %632 = vadd.xlane.f32.xlu0 %v631
    %v633 = vpop.xlane.xlu0 %632
    %v634 = vadd.f32 %v313, %v314
    %635 = vadd.xlane.f32.xlu0 %v634
    %v636 = vpop.xlane.xlu0 %635
    %v637 = vadd.f32 %v315, %v316
    %638 = vadd.xlane.f32.xlu0 %v637
    %v639 = vpop.xlane.xlu0 %638
    %v640 = vadd.f32 %v317, %v318
    %641 = vadd.xlane.f32.xlu0 %v640
    %v642 = vpop.xlane.xlu0 %641
    %v643 = vadd.f32 %v319, %v320
    %644 = vadd.xlane.f32.xlu0 %v643
    %v645 = vpop.xlane.xlu0 %644
    %v646 = vadd.f32 %v321, %v322
    %647 = vadd.xlane.f32.xlu0 %v646
    %v648 = vpop.xlane.xlu0 %647
    %v649 = vadd.f32 %v323, %v324
    %650 = vadd.xlane.f32.xlu0 %v649
    %v651 = vpop.xlane.xlu0 %650
    %v652 = vadd.f32 %v325, %v326
    %653 = vadd.xlane.f32.xlu0 %v652
    %v654 = vpop.xlane.xlu0 %653
    %v655 = vadd.f32 %v327, %v328
    %656 = vadd.xlane.f32.xlu0 %v655
    %v657 = vpop.xlane.xlu0 %656
    %v658 = vadd.f32 %v329, %v330
    %659 = vadd.xlane.f32.xlu0 %v658
    %v660 = vpop.xlane.xlu0 %659
    %v661 = vadd.f32 %v331, %v332
    %662 = vadd.xlane.f32.xlu0 %v661
    %v663 = vpop.xlane.xlu0 %662
    %v664 = vadd.f32 %v333, %v334
    %665 = vadd.xlane.f32.xlu0 %v664
    %v666 = vpop.xlane.xlu0 %665
    %v667 = vadd.f32 %v335, %v336
    %668 = vadd.xlane.f32.xlu0 %v667
    %v669 = vpop.xlane.xlu0 %668
    %v670 = vadd.f32 %v337, %v338
    %671 = vadd.xlane.f32.xlu0 %v670
    %v672 = vpop.xlane.xlu0 %671
    %v673 = vadd.f32 %v339, %v340
    %674 = vadd.xlane.f32.xlu0 %v673
    %v675 = vpop.xlane.xlu0 %674
    %v676 = vadd.f32 %v341, %v342
    %677 = vadd.xlane.f32.xlu0 %v676
    %v678 = vpop.xlane.xlu0 %677
    %v679 = vadd.f32 %v343, %v344
    %680 = vadd.xlane.f32.xlu0 %v679
    %v681 = vpop.xlane.xlu0 %680
    %v682 = vadd.f32 %v345, %v346
    %683 = vadd.xlane.f32.xlu0 %v682
    %v684 = vpop.xlane.xlu0 %683
    %v685 = vadd.f32 %v347, %v348
    %686 = vadd.xlane.f32.xlu0 %v685
    %v687 = vpop.xlane.xlu0 %686
    %v688 = vadd.f32 %v349, %v350
    %689 = vadd.xlane.f32.xlu0 %v688
    %v690 = vpop.xlane.xlu0 %689
    %v691 = vadd.f32 %v351, %v352
    %692 = vadd.xlane.f32.xlu0 %v691
    %v693 = vpop.xlane.xlu0 %692
    %v694 = vadd.f32 %v353, %v354
    %695 = vadd.xlane.f32.xlu0 %v694
    %v696 = vpop.xlane.xlu0 %695
    %v697 = vadd.f32 %v355, %v356
    %698 = vadd.xlane.f32.xlu0 %v697
    %v699 = vpop.xlane.xlu0 %698
    %v700 = vadd.f32 %v357, %v358
    %701 = vadd.xlane.f32.xlu0 %v700
    %v702 = vpop.xlane.xlu0 %701
    %v703 = vadd.f32 %v359, %v360
    %704 = vadd.xlane.f32.xlu0 %v703
    %v705 = vpop.xlane.xlu0 %704
    %v706 = vadd.f32 %v361, %v362
    %707 = vadd.xlane.f32.xlu0 %v706
    %v708 = vpop.xlane.xlu0 %707
    %v709 = vadd.f32 %v363, %v364
    %710 = vadd.xlane.f32.xlu0 %v709
    %v711 = vpop.xlane.xlu0 %710
    %v712 = vadd.f32 %v365, %v366
    %713 = vadd.xlane.f32.xlu0 %v712
    %v714 = vpop.xlane.xlu0 %713
    %v715 = vadd.f32 %v367, %v368
    %716 = vadd.xlane.f32.xlu0 %v715
    %v717 = vpop.xlane.xlu0 %716
    %v718 = vadd.f32 %v369, %v370
    %719 = vadd.xlane.f32.xlu0 %v718
    %v720 = vpop.xlane.xlu0 %719
    %v721 = vadd.f32 %v371, %v372
    %722 = vadd.xlane.f32.xlu0 %v721
    %v723 = vpop.xlane.xlu0 %722
    %v724 = vadd.f32 %v373, %v374
    %725 = vadd.xlane.f32.xlu0 %v724
    %v726 = vpop.xlane.xlu0 %725
    %v727 = vadd.f32 %v375, %v376
    %728 = vadd.xlane.f32.xlu0 %v727
    %v729 = vpop.xlane.xlu0 %728
    %v730 = vadd.f32 %v377, %v378
    %731 = vadd.xlane.f32.xlu0 %v730
    %v732 = vpop.xlane.xlu0 %731
    %v733 = vadd.f32 %v379, %v380
    %734 = vadd.xlane.f32.xlu0 %v733
    %v735 = vpop.xlane.xlu0 %734
    %v736 = vadd.f32 %v381, %v382
    %737 = vadd.xlane.f32.xlu0 %v736
    %v738 = vpop.xlane.xlu0 %737
    %v739 = vadd.f32 %v383, %v384
    %740 = vadd.xlane.f32.xlu0 %v739
    %v741 = vpop.xlane.xlu0 %740
    %v742 = vadd.f32 %v385, %v386
    %743 = vadd.xlane.f32.xlu0 %v742
    %v744 = vpop.xlane.xlu0 %743
    %v745 = vadd.f32 %v387, %v388
    %746 = vadd.xlane.f32.xlu0 %v745
    %v747 = vpop.xlane.xlu0 %746
    %v748 = vadd.f32 %v389, %v390
    %749 = vadd.xlane.f32.xlu0 %v748
    %v750 = vpop.xlane.xlu0 %749
    %v751 = vadd.f32 %v391, %v392
    %752 = vadd.xlane.f32.xlu0 %v751
    %v753 = vpop.xlane.xlu0 %752
    %v754 = vadd.f32 %v393, %v394
    %755 = vadd.xlane.f32.xlu0 %v754
    %v756 = vpop.xlane.xlu0 %755
    %v757 = vadd.f32 %v395, %v396
    %758 = vadd.xlane.f32.xlu0 %v757
    %v759 = vpop.xlane.xlu0 %758
    %v760 = vadd.f32 %v397, %v398
    %761 = vadd.xlane.f32.xlu0 %v760
    %v762 = vpop.xlane.xlu0 %761
    %v763 = vadd.f32 %v399, %v400
    %764 = vadd.xlane.f32.xlu0 %v763
    %v765 = vpop.xlane.xlu0 %764
    %v766 = vadd.f32 %v401, %v402
    %767 = vadd.xlane.f32.xlu0 %v766
    %v768 = vpop.xlane.xlu0 %767
    %v769 = vadd.f32 %v403, %v404
    %770 = vadd.xlane.f32.xlu0 %v769
    %v771 = vpop.xlane.xlu0 %770
    %v772 = vadd.f32 %v405, %v406
    %773 = vadd.xlane.f32.xlu0 %v772
    %v774 = vpop.xlane.xlu0 %773
    %v775 = vadd.f32 %v407, %v408
    %776 = vadd.xlane.f32.xlu0 %v775
    %v777 = vpop.xlane.xlu0 %776
    %v778 = vadd.f32 %v409, %v410
    %779 = vadd.xlane.f32.xlu0 %v778
    %v780 = vpop.xlane.xlu0 %779
    %v781 = vadd.f32 %v411, %v412
    %782 = vadd.xlane.f32.xlu0 %v781
    %v783 = vpop.xlane.xlu0 %782
    %v784 = vadd.f32 %v413, %v414
    %785 = vadd.xlane.f32.xlu0 %v784
    %v786 = vpop.xlane.xlu0 %785
    %v787 = vadd.f32 %v415, %v416
    %788 = vadd.xlane.f32.xlu0 %v787
    %v789 = vpop.xlane.xlu0 %788
    %v790 = vadd.f32 %v417, %v418
    %791 = vadd.xlane.f32.xlu0 %v790
    %v792 = vpop.xlane.xlu0 %791
    %v793 = vadd.f32 %v419, %v420
    %794 = vadd.xlane.f32.xlu0 %v793
    %v795 = vpop.xlane.xlu0 %794
    %v796 = vadd.f32 %v421, %v422
    %797 = vadd.xlane.f32.xlu0 %v796
    %v798 = vpop.xlane.xlu0 %797
    %v799 = vadd.f32 %v423, %v424
    %800 = vadd.xlane.f32.xlu0 %v799
    %v801 = vpop.xlane.xlu0 %800
    %v802 = vadd.f32 %v425, %v426
    %803 = vadd.xlane.f32.xlu0 %v802
    %v804 = vpop.xlane.xlu0 %803
    %v805 = vadd.f32 %v427, %v428
    %806 = vadd.xlane.f32.xlu0 %v805
    %v807 = vpop.xlane.xlu0 %806
    %v808 = vadd.f32 %v429, %v430
    %809 = vadd.xlane.f32.xlu0 %v808
    %v810 = vpop.xlane.xlu0 %809
    %v811 = vadd.f32 %v431, %v432
    %812 = vadd.xlane.f32.xlu0 %v811
    %v813 = vpop.xlane.xlu0 %812
    %v814 = vadd.f32 %v433, %v434
    %815 = vadd.xlane.f32.xlu0 %v814
    %v816 = vpop.xlane.xlu0 %815
    %v817 = vadd.f32 %v435, %v436
    %818 = vadd.xlane.f32.xlu0 %v817
    %v819 = vpop.xlane.xlu0 %818
    %v820 = vadd.f32 %v437, %v438
    %821 = vadd.xlane.f32.xlu0 %v820
    %v822 = vpop.xlane.xlu0 %821
    %v823 = vrcp.pop 256.0
    %v824 = vmul.f32 %v441, %v823
    %v825 = vmul.f32 %v444, %v823
    %v826 = vmul.f32 %v447, %v823
    %v827 = vmul.f32 %v450, %v823
    %v828 = vmul.f32 %v453, %v823
    %v829 = vmul.f32 %v456, %v823
    %v830 = vmul.f32 %v459, %v823
    %v831 = vmul.f32 %v462, %v823
    %v832 = vmul.f32 %v465, %v823
    %v833 = vmul.f32 %v468, %v823
    %v834 = vmul.f32 %v471, %v823
    %v835 = vmul.f32 %v474, %v823
    %v836 = vmul.f32 %v477, %v823
    %v837 = vmul.f32 %v480, %v823
    %v838 = vmul.f32 %v483, %v823
    %v839 = vmul.f32 %v486, %v823
    %v840 = vmul.f32 %v489, %v823
    %v841 = vmul.f32 %v492, %v823
    %v842 = vmul.f32 %v495, %v823
    %v843 = vmul.f32 %v498, %v823
    %v844 = vmul.f32 %v501, %v823
    %v845 = vmul.f32 %v504, %v823
    %v846 = vmul.f32 %v507, %v823
    %v847 = vmul.f32 %v510, %v823
    %v848 = vmul.f32 %v513, %v823
    %v849 = vmul.f32 %v516, %v823
    %v850 = vmul.f32 %v519, %v823
    %v851 = vmul.f32 %v522, %v823
    %v852 = vmul.f32 %v525, %v823
    %v853 = vmul.f32 %v528, %v823
    %v854 = vmul.f32 %v531, %v823
    %v855 = vmul.f32 %v534, %v823
    %v856 = vmul.f32 %v537, %v823
    %v857 = vmul.f32 %v540, %v823
    %v858 = vmul.f32 %v543, %v823
    %v859 = vmul.f32 %v546, %v823
    %v860 = vmul.f32 %v549, %v823
    %v861 = vmul.f32 %v552, %v823
    %v862 = vmul.f32 %v555, %v823
    %v863 = vmul.f32 %v558, %v823
    %v864 = vmul.f32 %v561, %v823
    %v865 = vmul.f32 %v564, %v823
    %v866 = vmul.f32 %v567, %v823
    %v867 = vmul.f32 %v570, %v823
    %v868 = vmul.f32 %v573, %v823
    %v869 = vmul.f32 %v576, %v823
    %v870 = vmul.f32 %v579, %v823
    %v871 = vmul.f32 %v582, %v823
    %v872 = vmul.f32 %v585, %v823
    %v873 = vmul.f32 %v588, %v823
    %v874 = vmul.f32 %v591, %v823
    %v875 = vmul.f32 %v594, %v823
    %v876 = vmul.f32 %v597, %v823
    %v877 = vmul.f32 %v600, %v823
    %v878 = vmul.f32 %v603, %v823
    %v879 = vmul.f32 %v606, %v823
    %v880 = vmul.f32 %v609, %v823
    %v881 = vmul.f32 %v612, %v823
    %v882 = vmul.f32 %v615, %v823
    %v883 = vmul.f32 %v618, %v823
    %v884 = vmul.f32 %v621, %v823
    %v885 = vmul.f32 %v624, %v823
    %v886 = vmul.f32 %v627, %v823
    %v887 = vmul.f32 %v630, %v823
    %v888 = vmul.f32 %v633, %v823
    %v889 = vmul.f32 %v636, %v823
    %v890 = vmul.f32 %v639, %v823
    %v891 = vmul.f32 %v642, %v823
    %v892 = vmul.f32 %v645, %v823
    %v893 = vmul.f32 %v648, %v823
    %v894 = vmul.f32 %v651, %v823
    %v895 = vmul.f32 %v654, %v823
    %v896 = vmul.f32 %v657, %v823
    %v897 = vmul.f32 %v660, %v823
    %v898 = vmul.f32 %v663, %v823
    %v899 = vmul.f32 %v666, %v823
    %v900 = vmul.f32 %v669, %v823
    %v901 = vmul.f32 %v672, %v823
    %v902 = vmul.f32 %v675, %v823
    %v903 = vmul.f32 %v678, %v823
    %v904 = vmul.f32 %v681, %v823
    %v905 = vmul.f32 %v684, %v823
    %v906 = vmul.f32 %v687, %v823
    %v907 = vmul.f32 %v690, %v823
    %v908 = vmul.f32 %v693, %v823
    %v909 = vmul.f32 %v696, %v823
    %v910 = vmul.f32 %v699, %v823
    %v911 = vmul.f32 %v702, %v823
    %v912 = vmul.f32 %v705, %v823
    %v913 = vmul.f32 %v708, %v823
    %v914 = vmul.f32 %v711, %v823
    %v915 = vmul.f32 %v714, %v823
    %v916 = vmul.f32 %v717, %v823
    %v917 = vmul.f32 %v720, %v823
    %v918 = vmul.f32 %v723, %v823
    %v919 = vmul.f32 %v726, %v823
    %v920 = vmul.f32 %v729, %v823
    %v921 = vmul.f32 %v732, %v823
    %v922 = vmul.f32 %v735, %v823
    %v923 = vmul.f32 %v738, %v823
    %v924 = vmul.f32 %v741, %v823
    %v925 = vmul.f32 %v744, %v823
    %v926 = vmul.f32 %v747, %v823
    %v927 = vmul.f32 %v750, %v823
    %v928 = vmul.f32 %v753, %v823
    %v929 = vmul.f32 %v756, %v823
    %v930 = vmul.f32 %v759, %v823
    %v931 = vmul.f32 %v762, %v823
    %v932 = vmul.f32 %v765, %v823
    %v933 = vmul.f32 %v768, %v823
    %v934 = vmul.f32 %v771, %v823
    %v935 = vmul.f32 %v774, %v823
    %v936 = vmul.f32 %v777, %v823
    %v937 = vmul.f32 %v780, %v823
    %v938 = vmul.f32 %v783, %v823
    %v939 = vmul.f32 %v786, %v823
    %v940 = vmul.f32 %v789, %v823
    %v941 = vmul.f32 %v792, %v823
    %v942 = vmul.f32 %v795, %v823
    %v943 = vmul.f32 %v798, %v823
    %v944 = vmul.f32 %v801, %v823
    %v945 = vmul.f32 %v804, %v823
    %v946 = vmul.f32 %v807, %v823
    %v947 = vmul.f32 %v810, %v823
    %v948 = vmul.f32 %v813, %v823
    %v949 = vmul.f32 %v816, %v823
    %v950 = vmul.f32 %v819, %v823
    %v951 = vmul.f32 %v822, %v823
    %v952 = vpack.c.bf16 %v824, %v824
    %v953 = vpack.c.bf16 %v825, %v825
    %v954 = vpack.c.bf16 %v826, %v826
    %v955 = vpack.c.bf16 %v827, %v827
    %v956 = vpack.c.bf16 %v828, %v828
    %v957 = vpack.c.bf16 %v829, %v829
    %v958 = vpack.c.bf16 %v830, %v830
    %v959 = vpack.c.bf16 %v831, %v831
    %v960 = vpack.c.bf16 %v832, %v832
    %v961 = vpack.c.bf16 %v833, %v833
    %v962 = vpack.c.bf16 %v834, %v834
    %v963 = vpack.c.bf16 %v835, %v835
    %v964 = vpack.c.bf16 %v836, %v836
    %v965 = vpack.c.bf16 %v837, %v837
    %v966 = vpack.c.bf16 %v838, %v838
    %v967 = vpack.c.bf16 %v839, %v839
    %v968 = vpack.c.bf16 %v840, %v840
    %v969 = vpack.c.bf16 %v841, %v841
    %v970 = vpack.c.bf16 %v842, %v842
    %v971 = vpack.c.bf16 %v843, %v843
    %v972 = vpack.c.bf16 %v844, %v844
    %v973 = vpack.c.bf16 %v845, %v845
    %v974 = vpack.c.bf16 %v846, %v846
    %v975 = vpack.c.bf16 %v847, %v847
    %v976 = vpack.c.bf16 %v848, %v848
    %v977 = vpack.c.bf16 %v849, %v849
    %v978 = vpack.c.bf16 %v850, %v850
    %v979 = vpack.c.bf16 %v851, %v851
    %v980 = vpack.c.bf16 %v852, %v852
    %v981 = vpack.c.bf16 %v853, %v853
    %v982 = vpack.c.bf16 %v854, %v854
    %v983 = vpack.c.bf16 %v855, %v855
    %v984 = vpack.c.bf16 %v856, %v856
    %v985 = vpack.c.bf16 %v857, %v857
    %v986 = vpack.c.bf16 %v858, %v858
    %v987 = vpack.c.bf16 %v859, %v859
    %v988 = vpack.c.bf16 %v860, %v860
    %v989 = vpack.c.bf16 %v861, %v861
    %v990 = vpack.c.bf16 %v862, %v862
    %v991 = vpack.c.bf16 %v863, %v863
    %v992 = vpack.c.bf16 %v864, %v864
    %v993 = vpack.c.bf16 %v865, %v865
    %v994 = vpack.c.bf16 %v866, %v866
    %v995 = vpack.c.bf16 %v867, %v867
    %v996 = vpack.c.bf16 %v868, %v868
    %v997 = vpack.c.bf16 %v869, %v869
    %v998 = vpack.c.bf16 %v870, %v870
    %v999 = vpack.c.bf16 %v871, %v871
    %v1000 = vpack.c.bf16 %v872, %v872
    %v1001 = vpack.c.bf16 %v873, %v873
    %v1002 = vpack.c.bf16 %v874, %v874
    %v1003 = vpack.c.bf16 %v875, %v875
    %v1004 = vpack.c.bf16 %v876, %v876
    %v1005 = vpack.c.bf16 %v877, %v877
    %v1006 = vpack.c.bf16 %v878, %v878
    %v1007 = vpack.c.bf16 %v879, %v879
    %v1008 = vpack.c.bf16 %v880, %v880
    %v1009 = vpack.c.bf16 %v881, %v881
    %v1010 = vpack.c.bf16 %v882, %v882
    %v1011 = vpack.c.bf16 %v883, %v883
    %v1012 = vpack.c.bf16 %v884, %v884
    %v1013 = vpack.c.bf16 %v885, %v885
    %v1014 = vpack.c.bf16 %v886, %v886
    %v1015 = vpack.c.bf16 %v887, %v887
    %v1016 = vpack.c.bf16 %v888, %v888
    %v1017 = vpack.c.bf16 %v889, %v889
    %v1018 = vpack.c.bf16 %v890, %v890
    %v1019 = vpack.c.bf16 %v891, %v891
    %v1020 = vpack.c.bf16 %v892, %v892
    %v1021 = vpack.c.bf16 %v893, %v893
    %v1022 = vpack.c.bf16 %v894, %v894
    %v1023 = vpack.c.bf16 %v895, %v895
    %v1024 = vpack.c.bf16 %v896, %v896
    %v1025 = vpack.c.bf16 %v897, %v897
    %v1026 = vpack.c.bf16 %v898, %v898
    %v1027 = vpack.c.bf16 %v899, %v899
    %v1028 = vpack.c.bf16 %v900, %v900
    %v1029 = vpack.c.bf16 %v901, %v901
    %v1030 = vpack.c.bf16 %v902, %v902
    %v1031 = vpack.c.bf16 %v903, %v903
    %v1032 = vpack.c.bf16 %v904, %v904
    %v1033 = vpack.c.bf16 %v905, %v905
    %v1034 = vpack.c.bf16 %v906, %v906
    %v1035 = vpack.c.bf16 %v907, %v907
    %v1036 = vpack.c.bf16 %v908, %v908
    %v1037 = vpack.c.bf16 %v909, %v909
    %v1038 = vpack.c.bf16 %v910, %v910
    %v1039 = vpack.c.bf16 %v911, %v911
    %v1040 = vpack.c.bf16 %v912, %v912
    %v1041 = vpack.c.bf16 %v913, %v913
    %v1042 = vpack.c.bf16 %v914, %v914
    %v1043 = vpack.c.bf16 %v915, %v915
    %v1044 = vpack.c.bf16 %v916, %v916
    %v1045 = vpack.c.bf16 %v917, %v917
    %v1046 = vpack.c.bf16 %v918, %v918
    %v1047 = vpack.c.bf16 %v919, %v919
    %v1048 = vpack.c.bf16 %v920, %v920
    %v1049 = vpack.c.bf16 %v921, %v921
    %v1050 = vpack.c.bf16 %v922, %v922
    %v1051 = vpack.c.bf16 %v923, %v923
    %v1052 = vpack.c.bf16 %v924, %v924
    %v1053 = vpack.c.bf16 %v925, %v925
    %v1054 = vpack.c.bf16 %v926, %v926
    %v1055 = vpack.c.bf16 %v927, %v927
    %v1056 = vpack.c.bf16 %v928, %v928
    %v1057 = vpack.c.bf16 %v929, %v929
    %v1058 = vpack.c.bf16 %v930, %v930
    %v1059 = vpack.c.bf16 %v931, %v931
    %v1060 = vpack.c.bf16 %v932, %v932
    %v1061 = vpack.c.bf16 %v933, %v933
    %v1062 = vpack.c.bf16 %v934, %v934
    %v1063 = vpack.c.bf16 %v935, %v935
    %v1064 = vpack.c.bf16 %v936, %v936
    %v1065 = vpack.c.bf16 %v937, %v937
    %v1066 = vpack.c.bf16 %v938, %v938
    %v1067 = vpack.c.bf16 %v939, %v939
    %v1068 = vpack.c.bf16 %v940, %v940
    %v1069 = vpack.c.bf16 %v941, %v941
    %v1070 = vpack.c.bf16 %v942, %v942
    %v1071 = vpack.c.bf16 %v943, %v943
    %v1072 = vpack.c.bf16 %v944, %v944
    %v1073 = vpack.c.bf16 %v945, %v945
    %v1074 = vpack.c.bf16 %v946, %v946
    %v1075 = vpack.c.bf16 %v947, %v947
    %v1076 = vpack.c.bf16 %v948, %v948
    %v1077 = vpack.c.bf16 %v949, %v949
    %v1078 = vpack.c.bf16 %v950, %v950
    %v1079 = vpack.c.bf16 %v951, %v951
    %v1080 = vld [vmem:[#allocation5] sm:$0xff]
    %v1209 = vunpack.c.l.b16 %v952
    %v1210 = vunpack.c.l.b16 %v953
    %v1211 = vunpack.c.l.b16 %v954
    %v1212 = vunpack.c.l.b16 %v955
    %v1213 = vunpack.c.l.b16 %v956
    %v1214 = vunpack.c.l.b16 %v957
    %v1215 = vunpack.c.l.b16 %v958
    %v1216 = vunpack.c.l.b16 %v959
    %v1217 = vunpack.c.l.b16 %v960
    %v1218 = vunpack.c.l.b16 %v961
    %v1219 = vunpack.c.l.b16 %v962
    %v1220 = vunpack.c.l.b16 %v963
    %v1221 = vunpack.c.l.b16 %v964
    %v1222 = vunpack.c.l.b16 %v965
    %v1223 = vunpack.c.l.b16 %v966
    %v1224 = vunpack.c.l.b16 %v967
    %v1225 = vunpack.c.l.b16 %v968
    %v1226 = vunpack.c.l.b16 %v969
    %v1227 = vunpack.c.l.b16 %v970
    %v1228 = vunpack.c.l.b16 %v971
    %v1229 = vunpack.c.l.b16 %v972
    %v1230 = vunpack.c.l.b16 %v973
    %v1231 = vunpack.c.l.b16 %v974
    %v1232 = vunpack.c.l.b16 %v975
    %v1233 = vunpack.c.l.b16 %v976
    %v1234 = vunpack.c.l.b16 %v977
    %v1235 = vunpack.c.l.b16 %v978
    %v1236 = vunpack.c.l.b16 %v979
    %v1237 = vunpack.c.l.b16 %v980
    %v1238 = vunpack.c.l.b16 %v981
    %v1239 = vunpack.c.l.b16 %v982
    %v1240 = vunpack.c.l.b16 %v983
    %v1241 = vunpack.c.l.b16 %v984
    %v1242 = vunpack.c.l.b16 %v985
    %v1243 = vunpack.c.l.b16 %v986
    %v1244 = vunpack.c.l.b16 %v987
    %v1245 = vunpack.c.l.b16 %v988
    %v1246 = vunpack.c.l.b16 %v989
    %v1247 = vunpack.c.l.b16 %v990
    %v1248 = vunpack.c.l.b16 %v991
    %v1249 = vunpack.c.l.b16 %v992
    %v1250 = vunpack.c.l.b16 %v993
    %v1251 = vunpack.c.l.b16 %v994
    %v1252 = vunpack.c.l.b16 %v995
    %v1253 = vunpack.c.l.b16 %v996
    %v1254 = vunpack.c.l.b16 %v997
    %v1255 = vunpack.c.l.b16 %v998
    %v1256 = vunpack.c.l.b16 %v999
    %v1257 = vunpack.c.l.b16 %v1000
    %v1258 = vunpack.c.l.b16 %v1001
    %v1259 = vunpack.c.l.b16 %v1002
    %v1260 = vunpack.c.l.b16 %v1003
    %v1261 = vunpack.c.l.b16 %v1004
    %v1262 = vunpack.c.l.b16 %v1005
    %v1263 = vunpack.c.l.b16 %v1006
    %v1264 = vunpack.c.l.b16 %v1007
    %v1265 = vunpack.c.l.b16 %v1008
    %v1266 = vunpack.c.l.b16 %v1009
    %v1267 = vunpack.c.l.b16 %v1010
    %v1268 = vunpack.c.l.b16 %v1011
    %v1269 = vunpack.c.l.b16 %v1012
    %v1270 = vunpack.c.l.b16 %v1013
    %v1271 = vunpack.c.l.b16 %v1014
    %v1272 = vunpack.c.l.b16 %v1015
    %v1273 = vunpack.c.l.b16 %v1016
    %v1274 = vunpack.c.l.b16 %v1017
    %v1275 = vunpack.c.l.b16 %v1018
    %v1276 = vunpack.c.l.b16 %v1019
    %v1277 = vunpack.c.l.b16 %v1020
    %v1278 = vunpack.c.l.b16 %v1021
    %v1279 = vunpack.c.l.b16 %v1022
    %v1280 = vunpack.c.l.b16 %v1023
    %v1281 = vunpack.c.l.b16 %v1024
    %v1282 = vunpack.c.l.b16 %v1025
    %v1283 = vunpack.c.l.b16 %v1026
    %v1284 = vunpack.c.l.b16 %v1027
    %v1285 = vunpack.c.l.b16 %v1028
    %v1286 = vunpack.c.l.b16 %v1029
    %v1287 = vunpack.c.l.b16 %v1030
    %v1288 = vunpack.c.l.b16 %v1031
    %v1289 = vunpack.c.l.b16 %v1032
    %v1290 = vunpack.c.l.b16 %v1033
    %v1291 = vunpack.c.l.b16 %v1034
    %v1292 = vunpack.c.l.b16 %v1035
    %v1293 = vunpack.c.l.b16 %v1036
    %v1294 = vunpack.c.l.b16 %v1037
    %v1295 = vunpack.c.l.b16 %v1038
    %v1296 = vunpack.c.l.b16 %v1039
    %v1297 = vunpack.c.l.b16 %v1040
    %v1298 = vunpack.c.l.b16 %v1041
    %v1299 = vunpack.c.l.b16 %v1042
    %v1300 = vunpack.c.l.b16 %v1043
    %v1301 = vunpack.c.l.b16 %v1044
    %v1302 = vunpack.c.l.b16 %v1045
    %v1303 = vunpack.c.l.b16 %v1046
    %v1304 = vunpack.c.l.b16 %v1047
    %v1305 = vunpack.c.l.b16 %v1048
    %v1306 = vunpack.c.l.b16 %v1049
    %v1307 = vunpack.c.l.b16 %v1050
    %v1308 = vunpack.c.l.b16 %v1051
    %v1309 = vunpack.c.l.b16 %v1052
    %v1310 = vunpack.c.l.b16 %v1053
    %v1311 = vunpack.c.l.b16 %v1054
    %v1312 = vunpack.c.l.b16 %v1055
    %v1313 = vunpack.c.l.b16 %v1056
    %v1314 = vunpack.c.l.b16 %v1057
    %v1315 = vunpack.c.l.b16 %v1058
    %v1316 = vunpack.c.l.b16 %v1059
    %v1317 = vunpack.c.l.b16 %v1060
    %v1318 = vunpack.c.l.b16 %v1061
    %v1319 = vunpack.c.l.b16 %v1062
    %v1320 = vunpack.c.l.b16 %v1063
    %v1321 = vunpack.c.l.b16 %v1064
    %v1322 = vunpack.c.l.b16 %v1065
    %v1323 = vunpack.c.l.b16 %v1066
    %v1324 = vunpack.c.l.b16 %v1067
    %v1325 = vunpack.c.l.b16 %v1068
    %v1326 = vunpack.c.l.b16 %v1069
    %v1327 = vunpack.c.l.b16 %v1070
    %v1328 = vunpack.c.l.b16 %v1071
    %v1329 = vunpack.c.l.b16 %v1072
    %v1330 = vunpack.c.l.b16 %v1073
    %v1331 = vunpack.c.l.b16 %v1074
    %v1332 = vunpack.c.l.b16 %v1075
    %v1333 = vunpack.c.l.b16 %v1076
    %v1334 = vunpack.c.l.b16 %v1077
    %v1335 = vunpack.c.l.b16 %v1078
    %v1336 = vunpack.c.l.b16 %v1079
    %v1337 = vlaneseq
    %v1338 = vand.u32 %v1337, 127
    %v1339 = vlaneseq
    %v1340 = vshrl.u32 %v1339, 7
    %v1341 = vsub.s32 %v1338, %v1340
    %v1342 = vrot.slane %v1209, %v1341
    %v1343 = vlaneseq
    %v1344 = vshrl.u32 %v1343, 7
    %v1345 = vsub.s32 %v1338, %v1344
    %v1346 = vrot.slane %v1210, %v1345
    %v1347 = vlaneseq
    %v1348 = vshrl.u32 %v1347, 7
    %v1349 = vsub.s32 %v1338, %v1348
    %v1350 = vrot.slane %v1211, %v1349
    %v1351 = vlaneseq
    %v1352 = vshrl.u32 %v1351, 7
    %v1353 = vsub.s32 %v1338, %v1352
    %v1354 = vrot.slane %v1212, %v1353
    %v1355 = vlaneseq
    %v1356 = vshrl.u32 %v1355, 7
    %v1357 = vsub.s32 %v1338, %v1356
    %v1358 = vrot.slane %v1213, %v1357
    %v1359 = vlaneseq
    %v1360 = vshrl.u32 %v1359, 7
    %v1361 = vsub.s32 %v1338, %v1360
    %v1362 = vrot.slane %v1214, %v1361
    %v1363 = vlaneseq
    %v1364 = vshrl.u32 %v1363, 7
    %v1365 = vsub.s32 %v1338, %v1364
    %v1366 = vrot.slane %v1215, %v1365
    %v1367 = vlaneseq
    %v1368 = vshrl.u32 %v1367, 7
    %v1369 = vsub.s32 %v1338, %v1368
    %v1370 = vrot.slane %v1216, %v1369
    %v1371 = vlaneseq
    %v1372 = vshrl.u32 %v1371, 7
    %v1373 = vsub.s32 %v1338, %v1372
    %v1374 = vrot.slane %v1217, %v1373
    %v1375 = vlaneseq
    %v1376 = vshrl.u32 %v1375, 7
    %v1377 = vsub.s32 %v1338, %v1376
    %v1378 = vrot.slane %v1218, %v1377
    %v1379 = vlaneseq
    %v1380 = vshrl.u32 %v1379, 7
    %v1381 = vsub.s32 %v1338, %v1380
    %v1382 = vrot.slane %v1219, %v1381
    %v1383 = vlaneseq
    %v1384 = vshrl.u32 %v1383, 7
    %v1385 = vsub.s32 %v1338, %v1384
    %v1386 = vrot.slane %v1220, %v1385
    %v1387 = vlaneseq
    %v1388 = vshrl.u32 %v1387, 7
    %v1389 = vsub.s32 %v1338, %v1388
    %v1390 = vrot.slane %v1221, %v1389
    %v1391 = vlaneseq
    %v1392 = vshrl.u32 %v1391, 7
    %v1393 = vsub.s32 %v1338, %v1392
    %v1394 = vrot.slane %v1222, %v1393
    %v1395 = vlaneseq
    %v1396 = vshrl.u32 %v1395, 7
    %v1397 = vsub.s32 %v1338, %v1396
    %v1398 = vrot.slane %v1223, %v1397
    %v1399 = vlaneseq
    %v1400 = vshrl.u32 %v1399, 7
    %v1401 = vsub.s32 %v1338, %v1400
    %v1402 = vrot.slane %v1224, %v1401
    %v1403 = vlaneseq
    %v1404 = vshrl.u32 %v1403, 7
    %v1405 = vsub.s32 %v1338, %v1404
    %v1406 = vrot.slane %v1225, %v1405
    %v1407 = vlaneseq
    %v1408 = vshrl.u32 %v1407, 7
    %v1409 = vsub.s32 %v1338, %v1408
    %v1410 = vrot.slane %v1226, %v1409
    %v1411 = vlaneseq
    %v1412 = vshrl.u32 %v1411, 7
    %v1413 = vsub.s32 %v1338, %v1412
    %v1414 = vrot.slane %v1227, %v1413
    %v1415 = vlaneseq
    %v1416 = vshrl.u32 %v1415, 7
    %v1417 = vsub.s32 %v1338, %v1416
    %v1418 = vrot.slane %v1228, %v1417
    %v1419 = vlaneseq
    %v1420 = vshrl.u32 %v1419, 7
    %v1421 = vsub.s32 %v1338, %v1420
    %v1422 = vrot.slane %v1229, %v1421
    %v1423 = vlaneseq
    %v1424 = vshrl.u32 %v1423, 7
    %v1425 = vsub.s32 %v1338, %v1424
    %v1426 = vrot.slane %v1230, %v1425
    %v1427 = vlaneseq
    %v1428 = vshrl.u32 %v1427, 7
    %v1429 = vsub.s32 %v1338, %v1428
    %v1430 = vrot.slane %v1231, %v1429
    %v1431 = vlaneseq
    %v1432 = vshrl.u32 %v1431, 7
    %v1433 = vsub.s32 %v1338, %v1432
    %v1434 = vrot.slane %v1232, %v1433
    %v1435 = vlaneseq
    %v1436 = vshrl.u32 %v1435, 7
    %v1437 = vsub.s32 %v1338, %v1436
    %v1438 = vrot.slane %v1233, %v1437
    %v1439 = vlaneseq
    %v1440 = vshrl.u32 %v1439, 7
    %v1441 = vsub.s32 %v1338, %v1440
    %v1442 = vrot.slane %v1234, %v1441
    %v1443 = vlaneseq
    %v1444 = vshrl.u32 %v1443, 7
    %v1445 = vsub.s32 %v1338, %v1444
    %v1446 = vrot.slane %v1235, %v1445
    %v1447 = vlaneseq
    %v1448 = vshrl.u32 %v1447, 7
    %v1449 = vsub.s32 %v1338, %v1448
    %v1450 = vrot.slane %v1236, %v1449
    %v1451 = vlaneseq
    %v1452 = vshrl.u32 %v1451, 7
    %v1453 = vsub.s32 %v1338, %v1452
    %v1454 = vrot.slane %v1237, %v1453
    %v1455 = vlaneseq
    %v1456 = vshrl.u32 %v1455, 7
    %v1457 = vsub.s32 %v1338, %v1456
    %v1458 = vrot.slane %v1238, %v1457
    %v1459 = vlaneseq
    %v1460 = vshrl.u32 %v1459, 7
    %v1461 = vsub.s32 %v1338, %v1460
    %v1462 = vrot.slane %v1239, %v1461
    %v1463 = vlaneseq
    %v1464 = vshrl.u32 %v1463, 7
    %v1465 = vsub.s32 %v1338, %v1464
    %v1466 = vrot.slane %v1240, %v1465
    %v1467 = vlaneseq
    %v1468 = vshrl.u32 %v1467, 7
    %v1469 = vsub.s32 %v1338, %v1468
    %v1470 = vrot.slane %v1241, %v1469
    %v1471 = vlaneseq
    %v1472 = vshrl.u32 %v1471, 7
    %v1473 = vsub.s32 %v1338, %v1472
    %v1474 = vrot.slane %v1242, %v1473
    %v1475 = vlaneseq
    %v1476 = vshrl.u32 %v1475, 7
    %v1477 = vsub.s32 %v1338, %v1476
    %v1478 = vrot.slane %v1243, %v1477
    %v1479 = vlaneseq
    %v1480 = vshrl.u32 %v1479, 7
    %v1481 = vsub.s32 %v1338, %v1480
    %v1482 = vrot.slane %v1244, %v1481
    %v1483 = vlaneseq
    %v1484 = vshrl.u32 %v1483, 7
    %v1485 = vsub.s32 %v1338, %v1484
    %v1486 = vrot.slane %v1245, %v1485
    %v1487 = vlaneseq
    %v1488 = vshrl.u32 %v1487, 7
    %v1489 = vsub.s32 %v1338, %v1488
    %v1490 = vrot.slane %v1246, %v1489
    %v1491 = vlaneseq
    %v1492 = vshrl.u32 %v1491, 7
    %v1493 = vsub.s32 %v1338, %v1492
    %v1494 = vrot.slane %v1247, %v1493
    %v1495 = vlaneseq
    %v1496 = vshrl.u32 %v1495, 7
    %v1497 = vsub.s32 %v1338, %v1496
    %v1498 = vrot.slane %v1248, %v1497
    %v1499 = vlaneseq
    %v1500 = vshrl.u32 %v1499, 7
    %v1501 = vsub.s32 %v1338, %v1500
    %v1502 = vrot.slane %v1249, %v1501
    %v1503 = vlaneseq
    %v1504 = vshrl.u32 %v1503, 7
    %v1505 = vsub.s32 %v1338, %v1504
    %v1506 = vrot.slane %v1250, %v1505
    %v1507 = vlaneseq
    %v1508 = vshrl.u32 %v1507, 7
    %v1509 = vsub.s32 %v1338, %v1508
    %v1510 = vrot.slane %v1251, %v1509
    %v1511 = vlaneseq
    %v1512 = vshrl.u32 %v1511, 7
    %v1513 = vsub.s32 %v1338, %v1512
    %v1514 = vrot.slane %v1252, %v1513
    %v1515 = vlaneseq
    %v1516 = vshrl.u32 %v1515, 7
    %v1517 = vsub.s32 %v1338, %v1516
    %v1518 = vrot.slane %v1253, %v1517
    %v1519 = vlaneseq
    %v1520 = vshrl.u32 %v1519, 7
    %v1521 = vsub.s32 %v1338, %v1520
    %v1522 = vrot.slane %v1254, %v1521
    %v1523 = vlaneseq
    %v1524 = vshrl.u32 %v1523, 7
    %v1525 = vsub.s32 %v1338, %v1524
    %v1526 = vrot.slane %v1255, %v1525
    %v1527 = vlaneseq
    %v1528 = vshrl.u32 %v1527, 7
    %v1529 = vsub.s32 %v1338, %v1528
    %v1530 = vrot.slane %v1256, %v1529
    %v1531 = vlaneseq
    %v1532 = vshrl.u32 %v1531, 7
    %v1533 = vsub.s32 %v1338, %v1532
    %v1534 = vrot.slane %v1257, %v1533
    %v1535 = vlaneseq
    %v1536 = vshrl.u32 %v1535, 7
    %v1537 = vsub.s32 %v1338, %v1536
    %v1538 = vrot.slane %v1258, %v1537
    %v1539 = vlaneseq
    %v1540 = vshrl.u32 %v1539, 7
    %v1541 = vsub.s32 %v1338, %v1540
    %v1542 = vrot.slane %v1259, %v1541
    %v1543 = vlaneseq
    %v1544 = vshrl.u32 %v1543, 7
    %v1545 = vsub.s32 %v1338, %v1544
    %v1546 = vrot.slane %v1260, %v1545
    %v1547 = vlaneseq
    %v1548 = vshrl.u32 %v1547, 7
    %v1549 = vsub.s32 %v1338, %v1548
    %v1550 = vrot.slane %v1261, %v1549
    %v1551 = vlaneseq
    %v1552 = vshrl.u32 %v1551, 7
    %v1553 = vsub.s32 %v1338, %v1552
    %v1554 = vrot.slane %v1262, %v1553
    %v1555 = vlaneseq
    %v1556 = vshrl.u32 %v1555, 7
    %v1557 = vsub.s32 %v1338, %v1556
    %v1558 = vrot.slane %v1263, %v1557
    %v1559 = vlaneseq
    %v1560 = vshrl.u32 %v1559, 7
    %v1561 = vsub.s32 %v1338, %v1560
    %v1562 = vrot.slane %v1264, %v1561
    %v1563 = vlaneseq
    %v1564 = vshrl.u32 %v1563, 7
    %v1565 = vsub.s32 %v1338, %v1564
    %v1566 = vrot.slane %v1265, %v1565
    %v1567 = vlaneseq
    %v1568 = vshrl.u32 %v1567, 7
    %v1569 = vsub.s32 %v1338, %v1568
    %v1570 = vrot.slane %v1266, %v1569
    %v1571 = vlaneseq
    %v1572 = vshrl.u32 %v1571, 7
    %v1573 = vsub.s32 %v1338, %v1572
    %v1574 = vrot.slane %v1267, %v1573
    %v1575 = vlaneseq
    %v1576 = vshrl.u32 %v1575, 7
    %v1577 = vsub.s32 %v1338, %v1576
    %v1578 = vrot.slane %v1268, %v1577
    %v1579 = vlaneseq
    %v1580 = vshrl.u32 %v1579, 7
    %v1581 = vsub.s32 %v1338, %v1580
    %v1582 = vrot.slane %v1269, %v1581
    %v1583 = vlaneseq
    %v1584 = vshrl.u32 %v1583, 7
    %v1585 = vsub.s32 %v1338, %v1584
    %v1586 = vrot.slane %v1270, %v1585
    %v1587 = vlaneseq
    %v1588 = vshrl.u32 %v1587, 7
    %v1589 = vsub.s32 %v1338, %v1588
    %v1590 = vrot.slane %v1271, %v1589
    %v1591 = vlaneseq
    %v1592 = vshrl.u32 %v1591, 7
    %v1593 = vsub.s32 %v1338, %v1592
    %v1594 = vrot.slane %v1272, %v1593
    %v1595 = vlaneseq
    %v1596 = vshrl.u32 %v1595, 7
    %v1597 = vsub.s32 %v1338, %v1596
    %v1598 = vrot.slane %v1273, %v1597
    %v1599 = vlaneseq
    %v1600 = vshrl.u32 %v1599, 7
    %v1601 = vsub.s32 %v1338, %v1600
    %v1602 = vrot.slane %v1274, %v1601
    %v1603 = vlaneseq
    %v1604 = vshrl.u32 %v1603, 7
    %v1605 = vsub.s32 %v1338, %v1604
    %v1606 = vrot.slane %v1275, %v1605
    %v1607 = vlaneseq
    %v1608 = vshrl.u32 %v1607, 7
    %v1609 = vsub.s32 %v1338, %v1608
    %v1610 = vrot.slane %v1276, %v1609
    %v1611 = vlaneseq
    %v1612 = vshrl.u32 %v1611, 7
    %v1613 = vsub.s32 %v1338, %v1612
    %v1614 = vrot.slane %v1277, %v1613
    %v1615 = vlaneseq
    %v1616 = vshrl.u32 %v1615, 7
    %v1617 = vsub.s32 %v1338, %v1616
    %v1618 = vrot.slane %v1278, %v1617
    %v1619 = vlaneseq
    %v1620 = vshrl.u32 %v1619, 7
    %v1621 = vsub.s32 %v1338, %v1620
    %v1622 = vrot.slane %v1279, %v1621
    %v1623 = vlaneseq
    %v1624 = vshrl.u32 %v1623, 7
    %v1625 = vsub.s32 %v1338, %v1624
    %v1626 = vrot.slane %v1280, %v1625
    %v1627 = vlaneseq
    %v1628 = vshrl.u32 %v1627, 7
    %v1629 = vsub.s32 %v1338, %v1628
    %v1630 = vrot.slane %v1281, %v1629
    %v1631 = vlaneseq
    %v1632 = vshrl.u32 %v1631, 7
    %v1633 = vsub.s32 %v1338, %v1632
    %v1634 = vrot.slane %v1282, %v1633
    %v1635 = vlaneseq
    %v1636 = vshrl.u32 %v1635, 7
    %v1637 = vsub.s32 %v1338, %v1636
    %v1638 = vrot.slane %v1283, %v1637
    %v1639 = vlaneseq
    %v1640 = vshrl.u32 %v1639, 7
    %v1641 = vsub.s32 %v1338, %v1640
    %v1642 = vrot.slane %v1284, %v1641
    %v1643 = vlaneseq
    %v1644 = vshrl.u32 %v1643, 7
    %v1645 = vsub.s32 %v1338, %v1644
    %v1646 = vrot.slane %v1285, %v1645
    %v1647 = vlaneseq
    %v1648 = vshrl.u32 %v1647, 7
    %v1649 = vsub.s32 %v1338, %v1648
    %v1650 = vrot.slane %v1286, %v1649
    %v1651 = vlaneseq
    %v1652 = vshrl.u32 %v1651, 7
    %v1653 = vsub.s32 %v1338, %v1652
    %v1654 = vrot.slane %v1287, %v1653
    %v1655 = vlaneseq
    %v1656 = vshrl.u32 %v1655, 7
    %v1657 = vsub.s32 %v1338, %v1656
    %v1658 = vrot.slane %v1288, %v1657
    %v1659 = vlaneseq
    %v1660 = vshrl.u32 %v1659, 7
    %v1661 = vsub.s32 %v1338, %v1660
    %v1662 = vrot.slane %v1289, %v1661
    %v1663 = vlaneseq
    %v1664 = vshrl.u32 %v1663, 7
    %v1665 = vsub.s32 %v1338, %v1664
    %v1666 = vrot.slane %v1290, %v1665
    %v1667 = vlaneseq
    %v1668 = vshrl.u32 %v1667, 7
    %v1669 = vsub.s32 %v1338, %v1668
    %v1670 = vrot.slane %v1291, %v1669
    %v1671 = vlaneseq
    %v1672 = vshrl.u32 %v1671, 7
    %v1673 = vsub.s32 %v1338, %v1672
    %v1674 = vrot.slane %v1292, %v1673
    %v1675 = vlaneseq
    %v1676 = vshrl.u32 %v1675, 7
    %v1677 = vsub.s32 %v1338, %v1676
    %v1678 = vrot.slane %v1293, %v1677
    %v1679 = vlaneseq
    %v1680 = vshrl.u32 %v1679, 7
    %v1681 = vsub.s32 %v1338, %v1680
    %v1682 = vrot.slane %v1294, %v1681
    %v1683 = vlaneseq
    %v1684 = vshrl.u32 %v1683, 7
    %v1685 = vsub.s32 %v1338, %v1684
    %v1686 = vrot.slane %v1295, %v1685
    %v1687 = vlaneseq
    %v1688 = vshrl.u32 %v1687, 7
    %v1689 = vsub.s32 %v1338, %v1688
    %v1690 = vrot.slane %v1296, %v1689
    %v1691 = vlaneseq
    %v1692 = vshrl.u32 %v1691, 7
    %v1693 = vsub.s32 %v1338, %v1692
    %v1694 = vrot.slane %v1297, %v1693
    %v1695 = vlaneseq
    %v1696 = vshrl.u32 %v1695, 7
    %v1697 = vsub.s32 %v1338, %v1696
    %v1698 = vrot.slane %v1298, %v1697
    %v1699 = vlaneseq
    %v1700 = vshrl.u32 %v1699, 7
    %v1701 = vsub.s32 %v1338, %v1700
    %v1702 = vrot.slane %v1299, %v1701
    %v1703 = vlaneseq
    %v1704 = vshrl.u32 %v1703, 7
    %v1705 = vsub.s32 %v1338, %v1704
    %v1706 = vrot.slane %v1300, %v1705
    %v1707 = vlaneseq
    %v1708 = vshrl.u32 %v1707, 7
    %v1709 = vsub.s32 %v1338, %v1708
    %v1710 = vrot.slane %v1301, %v1709
    %v1711 = vlaneseq
    %v1712 = vshrl.u32 %v1711, 7
    %v1713 = vsub.s32 %v1338, %v1712
    %v1714 = vrot.slane %v1302, %v1713
    %v1715 = vlaneseq
    %v1716 = vshrl.u32 %v1715, 7
    %v1717 = vsub.s32 %v1338, %v1716
    %v1718 = vrot.slane %v1303, %v1717
    %v1719 = vlaneseq
    %v1720 = vshrl.u32 %v1719, 7
    %v1721 = vsub.s32 %v1338, %v1720
    %v1722 = vrot.slane %v1304, %v1721
    %v1723 = vlaneseq
    %v1724 = vshrl.u32 %v1723, 7
    %v1725 = vsub.s32 %v1338, %v1724
    %v1726 = vrot.slane %v1305, %v1725
    %v1727 = vlaneseq
    %v1728 = vshrl.u32 %v1727, 7
    %v1729 = vsub.s32 %v1338, %v1728
    %v1730 = vrot.slane %v1306, %v1729
    %v1731 = vlaneseq
    %v1732 = vshrl.u32 %v1731, 7
    %v1733 = vsub.s32 %v1338, %v1732
    %v1734 = vrot.slane %v1307, %v1733
    %v1735 = vlaneseq
    %v1736 = vshrl.u32 %v1735, 7
    %v1737 = vsub.s32 %v1338, %v1736
    %v1738 = vrot.slane %v1308, %v1737
    %v1739 = vlaneseq
    %v1740 = vshrl.u32 %v1739, 7
    %v1741 = vsub.s32 %v1338, %v1740
    %v1742 = vrot.slane %v1309, %v1741
    %v1743 = vlaneseq
    %v1744 = vshrl.u32 %v1743, 7
    %v1745 = vsub.s32 %v1338, %v1744
    %v1746 = vrot.slane %v1310, %v1745
    %v1747 = vlaneseq
    %v1748 = vshrl.u32 %v1747, 7
    %v1749 = vsub.s32 %v1338, %v1748
    %v1750 = vrot.slane %v1311, %v1749
    %v1751 = vlaneseq
    %v1752 = vshrl.u32 %v1751, 7
    %v1753 = vsub.s32 %v1338, %v1752
    %v1754 = vrot.slane %v1312, %v1753
    %v1755 = vlaneseq
    %v1756 = vshrl.u32 %v1755, 7
    %v1757 = vsub.s32 %v1338, %v1756
    %v1758 = vrot.slane %v1313, %v1757
    %v1759 = vlaneseq
    %v1760 = vshrl.u32 %v1759, 7
    %v1761 = vsub.s32 %v1338, %v1760
    %v1762 = vrot.slane %v1314, %v1761
    %v1763 = vlaneseq
    %v1764 = vshrl.u32 %v1763, 7
    %v1765 = vsub.s32 %v1338, %v1764
    %v1766 = vrot.slane %v1315, %v1765
    %v1767 = vlaneseq
    %v1768 = vshrl.u32 %v1767, 7
    %v1769 = vsub.s32 %v1338, %v1768
    %v1770 = vrot.slane %v1316, %v1769
    %v1771 = vlaneseq
    %v1772 = vshrl.u32 %v1771, 7
    %v1773 = vsub.s32 %v1338, %v1772
    %v1774 = vrot.slane %v1317, %v1773
    %v1775 = vlaneseq
    %v1776 = vshrl.u32 %v1775, 7
    %v1777 = vsub.s32 %v1338, %v1776
    %v1778 = vrot.slane %v1318, %v1777
    %v1779 = vlaneseq
    %v1780 = vshrl.u32 %v1779, 7
    %v1781 = vsub.s32 %v1338, %v1780
    %v1782 = vrot.slane %v1319, %v1781
    %v1783 = vlaneseq
    %v1784 = vshrl.u32 %v1783, 7
    %v1785 = vsub.s32 %v1338, %v1784
    %v1786 = vrot.slane %v1320, %v1785
    %v1787 = vlaneseq
    %v1788 = vshrl.u32 %v1787, 7
    %v1789 = vsub.s32 %v1338, %v1788
    %v1790 = vrot.slane %v1321, %v1789
    %v1791 = vlaneseq
    %v1792 = vshrl.u32 %v1791, 7
    %v1793 = vsub.s32 %v1338, %v1792
    %v1794 = vrot.slane %v1322, %v1793
    %v1795 = vlaneseq
    %v1796 = vshrl.u32 %v1795, 7
    %v1797 = vsub.s32 %v1338, %v1796
    %v1798 = vrot.slane %v1323, %v1797
    %v1799 = vlaneseq
    %v1800 = vshrl.u32 %v1799, 7
    %v1801 = vsub.s32 %v1338, %v1800
    %v1802 = vrot.slane %v1324, %v1801
    %v1803 = vlaneseq
    %v1804 = vshrl.u32 %v1803, 7
    %v1805 = vsub.s32 %v1338, %v1804
    %v1806 = vrot.slane %v1325, %v1805
    %v1807 = vlaneseq
    %v1808 = vshrl.u32 %v1807, 7
    %v1809 = vsub.s32 %v1338, %v1808
    %v1810 = vrot.slane %v1326, %v1809
    %v1811 = vlaneseq
    %v1812 = vshrl.u32 %v1811, 7
    %v1813 = vsub.s32 %v1338, %v1812
    %v1814 = vrot.slane %v1327, %v1813
    %v1815 = vlaneseq
    %v1816 = vshrl.u32 %v1815, 7
    %v1817 = vsub.s32 %v1338, %v1816
    %v1818 = vrot.slane %v1328, %v1817
    %v1819 = vlaneseq
    %v1820 = vshrl.u32 %v1819, 7
    %v1821 = vsub.s32 %v1338, %v1820
    %v1822 = vrot.slane %v1329, %v1821
    %v1823 = vlaneseq
    %v1824 = vshrl.u32 %v1823, 7
    %v1825 = vsub.s32 %v1338, %v1824
    %v1826 = vrot.slane %v1330, %v1825
    %v1827 = vlaneseq
    %v1828 = vshrl.u32 %v1827, 7
    %v1829 = vsub.s32 %v1338, %v1828
    %v1830 = vrot.slane %v1331, %v1829
    %v1831 = vlaneseq
    %v1832 = vshrl.u32 %v1831, 7
    %v1833 = vsub.s32 %v1338, %v1832
    %v1834 = vrot.slane %v1332, %v1833
    %v1835 = vlaneseq
    %v1836 = vshrl.u32 %v1835, 7
    %v1837 = vsub.s32 %v1338, %v1836
    %v1838 = vrot.slane %v1333, %v1837
    %v1839 = vlaneseq
    %v1840 = vshrl.u32 %v1839, 7
    %v1841 = vsub.s32 %v1338, %v1840
    %v1842 = vrot.slane %v1334, %v1841
    %v1843 = vlaneseq
    %v1844 = vshrl.u32 %v1843, 7
    %v1845 = vsub.s32 %v1338, %v1844
    %v1846 = vrot.slane %v1335, %v1845
    %v1847 = vlaneseq
    %v1848 = vshrl.u32 %v1847, 7
    %v1849 = vsub.s32 %v1338, %v1848
    %v1850 = vrot.slane %v1336, %v1849
    %vm1851 = vcmask 1041409
    %v1852 = vsel %vm1851, %v1346, %v1342
    %vm1853 = vcmask 1042434
    %v1854 = vsel %vm1853, %v1350, %v1852
    %vm1855 = vcmask 1043459
    %v1856 = vsel %vm1855, %v1354, %v1854
    %vm1857 = vcmask 1044484
    %v1858 = vsel %vm1857, %v1358, %v1856
    %vm1859 = vcmask 1045509
    %v1860 = vsel %vm1859, %v1362, %v1858
    %vm1861 = vcmask 1046534
    %v1862 = vsel %vm1861, %v1366, %v1860
    %vm1863 = vcmask 1047559
    %v1864 = vsel %vm1863, %v1370, %v1862
    %v1865 = vsel %vm1851, %v1378, %v1374
    %v1866 = vsel %vm1853, %v1382, %v1865
    %v1867 = vsel %vm1855, %v1386, %v1866
    %v1868 = vsel %vm1857, %v1390, %v1867
    %v1869 = vsel %vm1859, %v1394, %v1868
    %v1870 = vsel %vm1861, %v1398, %v1869
    %v1871 = vsel %vm1863, %v1402, %v1870
    %v1872 = vsel %vm1851, %v1410, %v1406
    %v1873 = vsel %vm1853, %v1414, %v1872
    %v1874 = vsel %vm1855, %v1418, %v1873
    %v1875 = vsel %vm1857, %v1422, %v1874
    %v1876 = vsel %vm1859, %v1426, %v1875
    %v1877 = vsel %vm1861, %v1430, %v1876
    %v1878 = vsel %vm1863, %v1434, %v1877
    %v1879 = vsel %vm1851, %v1442, %v1438
    %v1880 = vsel %vm1853, %v1446, %v1879
    %v1881 = vsel %vm1855, %v1450, %v1880
    %v1882 = vsel %vm1857, %v1454, %v1881
    %v1883 = vsel %vm1859, %v1458, %v1882
    %v1884 = vsel %vm1861, %v1462, %v1883
    %v1885 = vsel %vm1863, %v1466, %v1884
    %v1886 = vsel %vm1851, %v1474, %v1470
    %v1887 = vsel %vm1853, %v1478, %v1886
    %v1888 = vsel %vm1855, %v1482, %v1887
    %v1889 = vsel %vm1857, %v1486, %v1888
    %v1890 = vsel %vm1859, %v1490, %v1889
    %v1891 = vsel %vm1861, %v1494, %v1890
    %v1892 = vsel %vm1863, %v1498, %v1891
    %v1893 = vsel %vm1851, %v1506, %v1502
    %v1894 = vsel %vm1853, %v1510, %v1893
    %v1895 = vsel %vm1855, %v1514, %v1894
    %v1896 = vsel %vm1857, %v1518, %v1895
    %v1897 = vsel %vm1859, %v1522, %v1896
    %v1898 = vsel %vm1861, %v1526, %v1897
    %v1899 = vsel %vm1863, %v1530, %v1898
    %v1900 = vsel %vm1851, %v1538, %v1534
    %v1901 = vsel %vm1853, %v1542, %v1900
    %v1902 = vsel %vm1855, %v1546, %v1901
    %v1903 = vsel %vm1857, %v1550, %v1902
    %v1904 = vsel %vm1859, %v1554, %v1903
    %v1905 = vsel %vm1861, %v1558, %v1904
    %v1906 = vsel %vm1863, %v1562, %v1905
    %v1907 = vsel %vm1851, %v1570, %v1566
    %v1908 = vsel %vm1853, %v1574, %v1907
    %v1909 = vsel %vm1855, %v1578, %v1908
    %v1910 = vsel %vm1857, %v1582, %v1909
    %v1911 = vsel %vm1859, %v1586, %v1910
    %v1912 = vsel %vm1861, %v1590, %v1911
    %v1913 = vsel %vm1863, %v1594, %v1912
    %v1914 = vsel %vm1851, %v1602, %v1598
    %v1915 = vsel %vm1853, %v1606, %v1914
    %v1916 = vsel %vm1855, %v1610, %v1915
    %v1917 = vsel %vm1857, %v1614, %v1916
    %v1918 = vsel %vm1859, %v1618, %v1917
    %v1919 = vsel %vm1861, %v1622, %v1918
    %v1920 = vsel %vm1863, %v1626, %v1919
    %v1921 = vsel %vm1851, %v1634, %v1630
    %v1922 = vsel %vm1853, %v1638, %v1921
    %v1923 = vsel %vm1855, %v1642, %v1922
    %v1924 = vsel %vm1857, %v1646, %v1923
    %v1925 = vsel %vm1859, %v1650, %v1924
    %v1926 = vsel %vm1861, %v1654, %v1925
    %v1927 = vsel %vm1863, %v1658, %v1926
    %v1928 = vsel %vm1851, %v1666, %v1662
    %v1929 = vsel %vm1853, %v1670, %v1928
    %v1930 = vsel %vm1855, %v1674, %v1929
    %v1931 = vsel %vm1857, %v1678, %v1930
    %v1932 = vsel %vm1859, %v1682, %v1931
    %v1933 = vsel %vm1861, %v1686, %v1932
    %v1934 = vsel %vm1863, %v1690, %v1933
    %v1935 = vsel %vm1851, %v1698, %v1694
    %v1936 = vsel %vm1853, %v1702, %v1935
    %v1937 = vsel %vm1855, %v1706, %v1936
    %v1938 = vsel %vm1857, %v1710, %v1937
    %v1939 = vsel %vm1859, %v1714, %v1938
    %v1940 = vsel %vm1861, %v1718, %v1939
    %v1941 = vsel %vm1863, %v1722, %v1940
    %v1942 = vsel %vm1851, %v1730, %v1726
    %v1943 = vsel %vm1853, %v1734, %v1942
    %v1944 = vsel %vm1855, %v1738, %v1943
    %v1945 = vsel %vm1857, %v1742, %v1944
    %v1946 = vsel %vm1859, %v1746, %v1945
    %v1947 = vsel %vm1861, %v1750, %v1946
    %v1948 = vsel %vm1863, %v1754, %v1947
    %v1949 = vsel %vm1851, %v1762, %v1758
    %v1950 = vsel %vm1853, %v1766, %v1949
    %v1951 = vsel %vm1855, %v1770, %v1950
    %v1952 = vsel %vm1857, %v1774, %v1951
    %v1953 = vsel %vm1859, %v1778, %v1952
    %v1954 = vsel %vm1861, %v1782, %v1953
    %v1955 = vsel %vm1863, %v1786, %v1954
    %v1956 = vsel %vm1851, %v1794, %v1790
    %v1957 = vsel %vm1853, %v1798, %v1956
    %v1958 = vsel %vm1855, %v1802, %v1957
    %v1959 = vsel %vm1857, %v1806, %v1958
    %v1960 = vsel %vm1859, %v1810, %v1959
    %v1961 = vsel %vm1861, %v1814, %v1960
    %v1962 = vsel %vm1863, %v1818, %v1961
    %v1963 = vsel %vm1851, %v1826, %v1822
    %v1964 = vsel %vm1853, %v1830, %v1963
    %v1965 = vsel %vm1855, %v1834, %v1964
    %v1966 = vsel %vm1857, %v1838, %v1965
    %v1967 = vsel %vm1859, %v1842, %v1966
    %v1968 = vsel %vm1861, %v1846, %v1967
    %v1969 = vsel %vm1863, %v1850, %v1968
    %v1970 = vpack.c.b16 %v1871, %v1864
    %v1971 = vpack.c.b16 %v1885, %v1878
    %v1972 = vpack.c.b16 %v1899, %v1892
    %v1973 = vpack.c.b16 %v1913, %v1906
    %v1974 = vpack.c.b16 %v1927, %v1920
    %v1975 = vpack.c.b16 %v1941, %v1934
    %v1976 = vpack.c.b16 %v1955, %v1948
    %v1977 = vpack.c.b16 %v1969, %v1962
    %v1979 = vunpack.c.l.b16 %v1080
    %v1980 = vunpack.c.h.b16 %v1080
    %v1981 = vpack.c.b16 %v1979, %v1979
    %v1982 = vpack.c.b16 %v1980, %v1980
    %vm1983 = vcmask 64512
    %v1985 = vsel %vm1983, %v1970, 0
    %v1988 = vsel %vm1983, %v1971, 0
    %v1991 = vsel %vm1983, %v1972, 0
    %v1994 = vsel %vm1983, %v1973, 0
    %v1997 = vsel %vm1983, %v1974, 0
    %v2000 = vsel %vm1983, %v1975, 0
    %v2003 = vsel %vm1983, %v1976, 0
    %v2006 = vsel %vm1983, %v1977, 0
    %vm2008 = vcmask 1043456
    %v2010 = vsel %vm2008, %v1981, 0
    %v2013 = vsel %vm2008, %v1982, 0
    %2015 = vmatprep.subr.bf16.mxu0 %v2013
    %2016 = vmatpush1.bf16.msra.mxu0 %v2010
    %2017 = vmatprep.subr.bf16.mxu0 0
    %2018 = vmatpush1.bf16.msra.mxu0 0
    %2019 = vmatprep.subr.bf16.mxu0 0
    %2020 = vmatpush1.bf16.msra.mxu0 0
    %2021 = vmatprep.subr.bf16.mxu0 0
    %2022 = vmatpush1.bf16.msra.mxu0 0
    %2023 = vmatprep.subr.bf16.mxu0 0
    %2024 = vmatpush1.bf16.msra.mxu0 0
    %2025 = vmatprep.subr.bf16.mxu0 0
    %2026 = vmatpush1.bf16.msra.mxu0 0
    %2027 = vmatprep.subr.bf16.mxu0 0
    %2028 = vmatpush1.bf16.msra.mxu0 0
    %2029 = vmatprep.subr.bf16.mxu0 0
    %2030 = vmatpush1.bf16.msra.mxu0 0
    %2031 = vmatprep.subr.bf16.mxu0 0
    %2032 = vmatpush1.bf16.msra.mxu0 0
    %2033 = vmatprep.subr.bf16.mxu0 0
    %2034 = vmatpush1.bf16.msra.mxu0 0
    %2035 = vmatprep.subr.bf16.mxu0 0
    %2036 = vmatpush1.bf16.msra.mxu0 0
    %2037 = vmatprep.subr.bf16.mxu0 0
    %2038 = vmatpush1.bf16.msra.mxu0 0
    %2039 = vmatprep.subr.bf16.mxu0 0
    %2040 = vmatpush1.bf16.msra.mxu0 0
    %2041 = vmatprep.subr.bf16.mxu0 0
    %2042 = vmatpush1.bf16.msra.mxu0 0
    %2043 = vmatprep.subr.bf16.mxu0 0
    %2044 = vmatpush1.bf16.msra.mxu0 0
    %2045 = vmatprep.subr.bf16.mxu0 0
    %2046 = vmatpush1.bf16.msra.mxu0 0
    %2047 = vmatprep.mubr.bf16.mxu0 0
    %2048 = vmatmul.mubr.bf16.gmra.mrb[0].mxu0 %v1985
    %v2049 = vpop.f32.mrb[0].mxu0
    %v2050 = vadd.f32 0.0, %v2049
    %v2051 = vpop.f32.mrb[0].mxu0
    %v2052 = vadd.f32 0.0, %v2051
    %v2053 = vpop.f32.mrb[0].mxu0
    %v2054 = vadd.f32 0.0, %v2053
    %v2055 = vpop.f32.mrb[0].mxu0
    %v2056 = vadd.f32 0.0, %v2055
    %2057 = vmatprep.mubr.bf16.mxu0 0
    %2058 = vmatmul.mubr.bf16.gmra.mrb[0].mxu0 %v1988
    %v2059 = vpop.f32.mrb[0].mxu0
    %v2060 = vadd.f32 0.0, %v2059
    %v2061 = vpop.f32.mrb[0].mxu0
    %v2062 = vadd.f32 0.0, %v2061
    %v2063 = vpop.f32.mrb[0].mxu0
    %v2064 = vadd.f32 0.0, %v2063
    %v2065 = vpop.f32.mrb[0].mxu0
    %v2066 = vadd.f32 0.0, %v2065
    %2067 = vmatprep.mubr.bf16.mxu0 0
    %2068 = vmatmul.mubr.bf16.gmra.mrb[0].mxu0 %v1991
    %v2069 = vpop.f32.mrb[0].mxu0
    %v2070 = vadd.f32 0.0, %v2069
    %v2071 = vpop.f32.mrb[0].mxu0
    %v2072 = vadd.f32 0.0, %v2071
    %v2073 = vpop.f32.mrb[0].mxu0
    %v2074 = vadd.f32 0.0, %v2073
    %v2075 = vpop.f32.mrb[0].mxu0
    %v2076 = vadd.f32 0.0, %v2075
    %2077 = vmatprep.mubr.bf16.mxu0 0
    %2078 = vmatmul.mubr.bf16.gmra.mrb[0].mxu0 %v1994
    %v2079 = vpop.f32.mrb[0].mxu0
    %v2080 = vadd.f32 0.0, %v2079
    %v2081 = vpop.f32.mrb[0].mxu0
    %v2082 = vadd.f32 0.0, %v2081
    %v2083 = vpop.f32.mrb[0].mxu0
    %v2084 = vadd.f32 0.0, %v2083
    %v2085 = vpop.f32.mrb[0].mxu0
    %v2086 = vadd.f32 0.0, %v2085
    %2087 = vmatprep.mubr.bf16.mxu0 0
    %2088 = vmatmul.mubr.bf16.gmra.mrb[0].mxu0 %v1997
    %v2089 = vpop.f32.mrb[0].mxu0
    %v2090 = vadd.f32 0.0, %v2089
    %v2091 = vpop.f32.mrb[0].mxu0
    %v2092 = vadd.f32 0.0, %v2091
    %v2093 = vpop.f32.mrb[0].mxu0
    %v2094 = vadd.f32 0.0, %v2093
    %v2095 = vpop.f32.mrb[0].mxu0
    %v2096 = vadd.f32 0.0, %v2095
    %2097 = vmatprep.mubr.bf16.mxu0 0
    %2098 = vmatmul.mubr.bf16.gmra.mrb[0].mxu0 %v2000
    %v2099 = vpop.f32.mrb[0].mxu0
    %v2100 = vadd.f32 0.0, %v2099
    %v2101 = vpop.f32.mrb[0].mxu0
    %v2102 = vadd.f32 0.0, %v2101
    %v2103 = vpop.f32.mrb[0].mxu0
    %v2104 = vadd.f32 0.0, %v2103
    %v2105 = vpop.f32.mrb[0].mxu0
    %v2106 = vadd.f32 0.0, %v2105
    %2107 = vmatprep.mubr.bf16.mxu0 0
    %2108 = vmatmul.mubr.bf16.gmra.mrb[0].mxu0 %v2003
    %v2109 = vpop.f32.mrb[0].mxu0
    %v2110 = vadd.f32 0.0, %v2109
    %v2111 = vpop.f32.mrb[0].mxu0
    %v2112 = vadd.f32 0.0, %v2111
    %v2113 = vpop.f32.mrb[0].mxu0
    %v2114 = vadd.f32 0.0, %v2113
    %v2115 = vpop.f32.mrb[0].mxu0
    %v2116 = vadd.f32 0.0, %v2115
    %2117 = vmatprep.mubr.bf16.mxu0 0
    %2118 = vmatmul.mubr.bf16.gmra.mrb[0].mxu0 %v2006
    %v2119 = vpop.f32.mrb[0].mxu0
    %v2120 = vadd.f32 0.0, %v2119
    %v2121 = vpop.f32.mrb[0].mxu0
    %v2122 = vadd.f32 0.0, %v2121
    %v2123 = vpop.f32.mrb[0].mxu0
    %v2124 = vadd.f32 0.0, %v2123
    %v2125 = vpop.f32.mrb[0].mxu0
    %v2126 = vadd.f32 0.0, %v2125
    %2127 = vdwg.mxu0
    %v2128 = vmax.f32 %v2050, 0.0
    %v2129 = vmax.f32 %v2052, 0.0
    %v2130 = vmax.f32 %v2054, 0.0
    %v2131 = vmax.f32 %v2056, 0.0
    %v2132 = vmax.f32 %v2060, 0.0
    %v2133 = vmax.f32 %v2062, 0.0
    %v2134 = vmax.f32 %v2064, 0.0
    %v2135 = vmax.f32 %v2066, 0.0
    %v2136 = vmax.f32 %v2070, 0.0
    %v2137 = vmax.f32 %v2072, 0.0
    %v2138 = vmax.f32 %v2074, 0.0
    %v2139 = vmax.f32 %v2076, 0.0
    %v2140 = vmax.f32 %v2080, 0.0
    %v2141 = vmax.f32 %v2082, 0.0
    %v2142 = vmax.f32 %v2084, 0.0
    %v2143 = vmax.f32 %v2086, 0.0
    %v2144 = vmax.f32 %v2090, 0.0
    %v2145 = vmax.f32 %v2092, 0.0
    %v2146 = vmax.f32 %v2094, 0.0
    %v2147 = vmax.f32 %v2096, 0.0
    %v2148 = vmax.f32 %v2100, 0.0
    %v2149 = vmax.f32 %v2102, 0.0
    %v2150 = vmax.f32 %v2104, 0.0
    %v2151 = vmax.f32 %v2106, 0.0
    %v2152 = vmax.f32 %v2110, 0.0
    %v2153 = vmax.f32 %v2112, 0.0
    %v2154 = vmax.f32 %v2114, 0.0
    %v2155 = vmax.f32 %v2116, 0.0
    %v2156 = vmax.f32 %v2120, 0.0
    %v2157 = vmax.f32 %v2122, 0.0
    %v2158 = vmax.f32 %v2124, 0.0
    %v2159 = vmax.f32 %v2126, 0.0
    %v2160 = vpack.c.bf16 %v2130, %v2128
    %v2161 = vpack.c.bf16 %v2131, %v2129
    %v2162 = vpack.c.bf16 %v2134, %v2132
    %v2163 = vpack.c.bf16 %v2135, %v2133
    %v2164 = vpack.c.bf16 %v2138, %v2136
    %v2165 = vpack.c.bf16 %v2139, %v2137
    %v2166 = vpack.c.bf16 %v2142, %v2140
    %v2167 = vpack.c.bf16 %v2143, %v2141
    %v2168 = vpack.c.bf16 %v2146, %v2144
    %v2169 = vpack.c.bf16 %v2147, %v2145
    %v2170 = vpack.c.bf16 %v2150, %v2148
    %v2171 = vpack.c.bf16 %v2151, %v2149
    %v2172 = vpack.c.bf16 %v2154, %v2152
    %v2173 = vpack.c.bf16 %v2155, %v2153
    %v2174 = vpack.c.bf16 %v2158, %v2156
    %v2175 = vpack.c.bf16 %v2159, %v2157
    %v2176 = vld [vmem:[#allocation7] sm:$0xf]
    %v2177 = vld [vmem:[#allocation7 + $0x4] sm:$0xf]
    %v2178 = vld [vmem:[#allocation7 + $0x8] sm:$0xf]
    %v2179 = vld [vmem:[#allocation7 + $0xc] sm:$0xf]
    %v2180 = vld [vmem:[#allocation7 + $0x10] sm:$0xf]
    %v2181 = vld [vmem:[#allocation7 + $0x14] sm:$0xf]
    %v2182 = vld [vmem:[#allocation7 + $0x18] sm:$0xf]
    %v2183 = vld [vmem:[#allocation7 + $0x1c] sm:$0xf]
    %v2184 = vld [vmem:[#allocation7 + $0x20] sm:$0xf]
    %v2185 = vld [vmem:[#allocation7 + $0x24] sm:$0xf]
    %v2186 = vld [vmem:[#allocation7 + $0x28] sm:$0xf]
    %v2187 = vld [vmem:[#allocation7 + $0x2c] sm:$0xf]
    %v2188 = vld [vmem:[#allocation7 + $0x30] sm:$0xf]
    %v2189 = vld [vmem:[#allocation7 + $0x34] sm:$0xf]
    %v2190 = vld [vmem:[#allocation7 + $0x38] sm:$0xf]
    %v2191 = vld [vmem:[#allocation7 + $0x3c] sm:$0xf]
    %v2192 = vld [vmem:[#allocation7 + $0x40] sm:$0xf]
    %v2193 = vld [vmem:[#allocation7 + $0x44] sm:$0xf]
    %v2194 = vld [vmem:[#allocation7 + $0x48] sm:$0xf]
    %v2195 = vld [vmem:[#allocation7 + $0x4c] sm:$0xf]
    %v2196 = vld [vmem:[#allocation7 + $0x50] sm:$0xf]
    %v2197 = vld [vmem:[#allocation7 + $0x54] sm:$0xf]
    %v2198 = vld [vmem:[#allocation7 + $0x58] sm:$0xf]
    %v2199 = vld [vmem:[#allocation7 + $0x5c] sm:$0xf]
    %v2200 = vld [vmem:[#allocation7 + $0x60] sm:$0xf]
    %v2201 = vld [vmem:[#allocation7 + $0x64] sm:$0xf]
    %v2202 = vld [vmem:[#allocation7 + $0x68] sm:$0xf]
    %v2203 = vld [vmem:[#allocation7 + $0x6c] sm:$0xf]
    %v2204 = vld [vmem:[#allocation7 + $0x70] sm:$0xf]
    %v2205 = vld [vmem:[#allocation7 + $0x74] sm:$0xf]
    %v2206 = vld [vmem:[#allocation7 + $0x78] sm:$0xf]
    %v2207 = vld [vmem:[#allocation7 + $0x7c] sm:$0xf]
    %v2240 = vunpack.c.l.b16 %v2176
    %v2241 = vunpack.c.l.b16 %v2177
    %v2242 = vunpack.c.l.b16 %v2178
    %v2243 = vunpack.c.l.b16 %v2179
    %v2244 = vunpack.c.l.b16 %v2180
    %v2245 = vunpack.c.l.b16 %v2181
    %v2246 = vunpack.c.l.b16 %v2182
    %v2247 = vunpack.c.l.b16 %v2183
    %v2248 = vunpack.c.l.b16 %v2184
    %v2249 = vunpack.c.l.b16 %v2185
    %v2250 = vunpack.c.l.b16 %v2186
    %v2251 = vunpack.c.l.b16 %v2187
    %v2252 = vunpack.c.l.b16 %v2188
    %v2253 = vunpack.c.l.b16 %v2189
    %v2254 = vunpack.c.l.b16 %v2190
    %v2255 = vunpack.c.l.b16 %v2191
    %v2256 = vunpack.c.l.b16 %v2192
    %v2257 = vunpack.c.l.b16 %v2193
    %v2258 = vunpack.c.l.b16 %v2194
    %v2259 = vunpack.c.l.b16 %v2195
    %v2260 = vunpack.c.l.b16 %v2196
    %v2261 = vunpack.c.l.b16 %v2197
    %v2262 = vunpack.c.l.b16 %v2198
    %v2263 = vunpack.c.l.b16 %v2199
    %v2264 = vunpack.c.l.b16 %v2200
    %v2265 = vunpack.c.l.b16 %v2201
    %v2266 = vunpack.c.l.b16 %v2202
    %v2267 = vunpack.c.l.b16 %v2203
    %v2268 = vunpack.c.l.b16 %v2204
    %v2269 = vunpack.c.l.b16 %v2205
    %v2270 = vunpack.c.l.b16 %v2206
    %v2271 = vunpack.c.l.b16 %v2207
    %v2272 = vpack.c.b16 %v2241, %v2240
    %v2273 = vpack.c.b16 %v2243, %v2242
    %v2274 = vpack.c.b16 %v2245, %v2244
    %v2275 = vpack.c.b16 %v2247, %v2246
    %v2276 = vpack.c.b16 %v2249, %v2248
    %v2277 = vpack.c.b16 %v2251, %v2250
    %v2278 = vpack.c.b16 %v2253, %v2252
    %v2279 = vpack.c.b16 %v2255, %v2254
    %v2280 = vpack.c.b16 %v2257, %v2256
    %v2281 = vpack.c.b16 %v2259, %v2258
    %v2282 = vpack.c.b16 %v2261, %v2260
    %v2283 = vpack.c.b16 %v2263, %v2262
    %v2284 = vpack.c.b16 %v2265, %v2264
    %v2285 = vpack.c.b16 %v2267, %v2266
    %v2286 = vpack.c.b16 %v2269, %v2268
    %v2287 = vpack.c.b16 %v2271, %v2270
    %2304 = vmatprep.subr.bf16.mxu0 0
    %2305 = vmatpush1.bf16.msra.mxu0 %v2272
    %2306 = vmatprep.subr.bf16.mxu0 0
    %2307 = vmatpush1.bf16.msra.mxu0 %v2273
    %2308 = vmatprep.subr.bf16.mxu0 0
    %2309 = vmatpush1.bf16.msra.mxu0 %v2274
    %2310 = vmatprep.subr.bf16.mxu0 0
    %2311 = vmatpush1.bf16.msra.mxu0 %v2275
    %2312 = vmatprep.subr.bf16.mxu0 0
    %2313 = vmatpush1.bf16.msra.mxu0 %v2276
    %2314 = vmatprep.subr.bf16.mxu0 0
    %2315 = vmatpush1.bf16.msra.mxu0 %v2277
    %2316 = vmatprep.subr.bf16.mxu0 0
    %2317 = vmatpush1.bf16.msra.mxu0 %v2278
    %2318 = vmatprep.subr.bf16.mxu0 0
    %2319 = vmatpush1.bf16.msra.mxu0 %v2279
    %2320 = vmatprep.subr.bf16.mxu0 0
    %2321 = vmatpush1.bf16.msra.mxu0 %v2280
    %2322 = vmatprep.subr.bf16.mxu0 0
    %2323 = vmatpush1.bf16.msra.mxu0 %v2281
    %2324 = vmatprep.subr.bf16.mxu0 0
    %2325 = vmatpush1.bf16.msra.mxu0 %v2282
    %2326 = vmatprep.subr.bf16.mxu0 0
    %2327 = vmatpush1.bf16.msra.mxu0 %v2283
    %2328 = vmatprep.subr.bf16.mxu0 0
    %2329 = vmatpush1.bf16.msra.mxu0 %v2284
    %2330 = vmatprep.subr.bf16.mxu0 0
    %2331 = vmatpush1.bf16.msra.mxu0 %v2285
    %2332 = vmatprep.subr.bf16.mxu0 0
    %2333 = vmatpush1.bf16.msra.mxu0 %v2286
    %2334 = vmatprep.subr.bf16.mxu0 0
    %2335 = vmatpush1.bf16.msra.mxu0 %v2287
    %2336 = vmatprep.mubr.bf16.mxu0 %v2161
    %2337 = vmatmul.mubr.bf16.gmra.mrb[0].mxu0 %v2160
    %v2338 = vpop.f32.mrb[0].mxu0
    %v2339 = vadd.f32 0.0, %v2338
    %v2340 = vpop.f32.mrb[0].mxu0
    %v2341 = vpop.f32.mrb[0].mxu0
    %v2342 = vadd.f32 0.0, %v2341
    %v2343 = vpop.f32.mrb[0].mxu0
    %2344 = vmatprep.mubr.bf16.mxu0 %v2163
    %2345 = vmatmul.mubr.bf16.gmra.mrb[0].mxu0 %v2162
    %v2346 = vpop.f32.mrb[0].mxu0
    %v2347 = vadd.f32 0.0, %v2346
    %v2348 = vpop.f32.mrb[0].mxu0
    %v2349 = vpop.f32.mrb[0].mxu0
    %v2350 = vadd.f32 0.0, %v2349
    %v2351 = vpop.f32.mrb[0].mxu0
    %2352 = vmatprep.mubr.bf16.mxu0 %v2165
    %2353 = vmatmul.mubr.bf16.gmra.mrb[0].mxu0 %v2164
    %v2354 = vpop.f32.mrb[0].mxu0
    %v2355 = vadd.f32 0.0, %v2354
    %v2356 = vpop.f32.mrb[0].mxu0
    %v2357 = vpop.f32.mrb[0].mxu0
    %v2358 = vadd.f32 0.0, %v2357
    %v2359 = vpop.f32.mrb[0].mxu0
    %2360 = vmatprep.mubr.bf16.mxu0 %v2167
    %2361 = vmatmul.mubr.bf16.gmra.mrb[0].mxu0 %v2166
    %v2362 = vpop.f32.mrb[0].mxu0
    %v2363 = vadd.f32 0.0, %v2362
    %v2364 = vpop.f32.mrb[0].mxu0
    %v2365 = vpop.f32.mrb[0].mxu0
    %v2366 = vadd.f32 0.0, %v2365
    %v2367 = vpop.f32.mrb[0].mxu0
    %2368 = vmatprep.mubr.bf16.mxu0 %v2169
    %2369 = vmatmul.mubr.bf16.gmra.mrb[0].mxu0 %v2168
    %v2370 = vpop.f32.mrb[0].mxu0
    %v2371 = vadd.f32 0.0, %v2370
    %v2372 = vpop.f32.mrb[0].mxu0
    %v2373 = vpop.f32.mrb[0].mxu0
    %v2374 = vadd.f32 0.0, %v2373
    %v2375 = vpop.f32.mrb[0].mxu0
    %2376 = vmatprep.mubr.bf16.mxu0 %v2171
    %2377 = vmatmul.mubr.bf16.gmra.mrb[0].mxu0 %v2170
    %v2378 = vpop.f32.mrb[0].mxu0
    %v2379 = vadd.f32 0.0, %v2378
    %v2380 = vpop.f32.mrb[0].mxu0
    %v2381 = vpop.f32.mrb[0].mxu0
    %v2382 = vadd.f32 0.0, %v2381
    %v2383 = vpop.f32.mrb[0].mxu0
    %2384 = vmatprep.mubr.bf16.mxu0 %v2173
    %2385 = vmatmul.mubr.bf16.gmra.mrb[0].mxu0 %v2172
    %v2386 = vpop.f32.mrb[0].mxu0
    %v2387 = vadd.f32 0.0, %v2386
    %v2388 = vpop.f32.mrb[0].mxu0
    %v2389 = vpop.f32.mrb[0].mxu0
    %v2390 = vadd.f32 0.0, %v2389
    %v2391 = vpop.f32.mrb[0].mxu0
    %2392 = vmatprep.mubr.bf16.mxu0 %v2175
    %2393 = vmatmul.mubr.bf16.gmra.mrb[0].mxu0 %v2174
    %v2394 = vpop.f32.mrb[0].mxu0
    %v2395 = vadd.f32 0.0, %v2394
    %v2396 = vpop.f32.mrb[0].mxu0
    %v2397 = vpop.f32.mrb[0].mxu0
    %v2398 = vadd.f32 0.0, %v2397
    %v2399 = vpop.f32.mrb[0].mxu0
    %2400 = vdwg.mxu0
    %v2401 = vmul.f32 %v2339, %v2339
    %v2402 = vmul.f32 %v2342, %v2342
    %v2403 = vmul.f32 %v2347, %v2347
    %v2404 = vmul.f32 %v2350, %v2350
    %v2405 = vmul.f32 %v2355, %v2355
    %v2406 = vmul.f32 %v2358, %v2358
    %v2407 = vmul.f32 %v2363, %v2363
    %v2408 = vmul.f32 %v2366, %v2366
    %v2409 = vmul.f32 %v2371, %v2371
    %v2410 = vmul.f32 %v2374, %v2374
    %v2411 = vmul.f32 %v2379, %v2379
    %v2412 = vmul.f32 %v2382, %v2382
    %v2413 = vmul.f32 %v2387, %v2387
    %v2414 = vmul.f32 %v2390, %v2390
    %v2415 = vmul.f32 %v2395, %v2395
    %v2416 = vmul.f32 %v2398, %v2398
    %2417 = vadd.xlane.f32.xlu0 %v2401
    %v2418 = vpop.xlane.xlu0 %2417
    %2419 = vadd.xlane.f32.xlu0 %v2402
    %v2420 = vpop.xlane.xlu0 %2419
    %2421 = vadd.xlane.f32.xlu0 %v2403
    %v2422 = vpop.xlane.xlu0 %2421
    %2423 = vadd.xlane.f32.xlu0 %v2404
    %v2424 = vpop.xlane.xlu0 %2423
    %2425 = vadd.xlane.f32.xlu0 %v2405
    %v2426 = vpop.xlane.xlu0 %2425
    %2427 = vadd.xlane.f32.xlu0 %v2406
    %v2428 = vpop.xlane.xlu0 %2427
    %2429 = vadd.xlane.f32.xlu0 %v2407
    %v2430 = vpop.xlane.xlu0 %2429
    %2431 = vadd.xlane.f32.xlu0 %v2408
    %v2432 = vpop.xlane.xlu0 %2431
    %2433 = vadd.xlane.f32.xlu0 %v2409
    %v2434 = vpop.xlane.xlu0 %2433
    %2435 = vadd.xlane.f32.xlu0 %v2410
    %v2436 = vpop.xlane.xlu0 %2435
    %2437 = vadd.xlane.f32.xlu0 %v2411
    %v2438 = vpop.xlane.xlu0 %2437
    %2439 = vadd.xlane.f32.xlu0 %v2412
    %v2440 = vpop.xlane.xlu0 %2439
    %2441 = vadd.xlane.f32.xlu0 %v2413
    %v2442 = vpop.xlane.xlu0 %2441
    %2443 = vadd.xlane.f32.xlu0 %v2414
    %v2444 = vpop.xlane.xlu0 %2443
    %2445 = vadd.xlane.f32.xlu0 %v2415
    %v2446 = vpop.xlane.xlu0 %2445
    %2447 = vadd.xlane.f32.xlu0 %v2416
    %v2448 = vpop.xlane.xlu0 %2447
    %v2449 = vrsqrt.pop %v2418
    %v2450 = vmul.f32 %v2418, %v2449
    %vm2451 = vcmp.eq.f32.partialorder %v2418, inf
    %v2452 = vsel %vm2451, %v2418, %v2450
    %vm2453 = vcmp.eq.f32.partialorder %v2418, 0.0
    %v2454 = vand.u32 %v2418, 2147483648
    %v2455 = vsel %vm2453, %v2454, %v2452
    %v2456 = vrsqrt.pop %v2420
    %v2457 = vmul.f32 %v2420, %v2456
    %vm2458 = vcmp.eq.f32.partialorder %v2420, inf
    %v2459 = vsel %vm2458, %v2420, %v2457
    %vm2460 = vcmp.eq.f32.partialorder %v2420, 0.0
    %v2461 = vand.u32 %v2420, 2147483648
    %v2462 = vsel %vm2460, %v2461, %v2459
    %v2463 = vrsqrt.pop %v2422
    %v2464 = vmul.f32 %v2422, %v2463
    %vm2465 = vcmp.eq.f32.partialorder %v2422, inf
    %v2466 = vsel %vm2465, %v2422, %v2464
    %vm2467 = vcmp.eq.f32.partialorder %v2422, 0.0
    %v2468 = vand.u32 %v2422, 2147483648
    %v2469 = vsel %vm2467, %v2468, %v2466
    %v2470 = vrsqrt.pop %v2424
    %v2471 = vmul.f32 %v2424, %v2470
    %vm2472 = vcmp.eq.f32.partialorder %v2424, inf
    %v2473 = vsel %vm2472, %v2424, %v2471
    %vm2474 = vcmp.eq.f32.partialorder %v2424, 0.0
    %v2475 = vand.u32 %v2424, 2147483648
    %v2476 = vsel %vm2474, %v2475, %v2473
    %v2477 = vrsqrt.pop %v2426
    %v2478 = vmul.f32 %v2426, %v2477
    %vm2479 = vcmp.eq.f32.partialorder %v2426, inf
    %v2480 = vsel %vm2479, %v2426, %v2478
    %vm2481 = vcmp.eq.f32.partialorder %v2426, 0.0
    %v2482 = vand.u32 %v2426, 2147483648
    %v2483 = vsel %vm2481, %v2482, %v2480
    %v2484 = vrsqrt.pop %v2428
    %v2485 = vmul.f32 %v2428, %v2484
    %vm2486 = vcmp.eq.f32.partialorder %v2428, inf
    %v2487 = vsel %vm2486, %v2428, %v2485
    %vm2488 = vcmp.eq.f32.partialorder %v2428, 0.0
    %v2489 = vand.u32 %v2428, 2147483648
    %v2490 = vsel %vm2488, %v2489, %v2487
    %v2491 = vrsqrt.pop %v2430
    %v2492 = vmul.f32 %v2430, %v2491
    %vm2493 = vcmp.eq.f32.partialorder %v2430, inf
    %v2494 = vsel %vm2493, %v2430, %v2492
    %vm2495 = vcmp.eq.f32.partialorder %v2430, 0.0
    %v2496 = vand.u32 %v2430, 2147483648
    %v2497 = vsel %vm2495, %v2496, %v2494
    %v2498 = vrsqrt.pop %v2432
    %v2499 = vmul.f32 %v2432, %v2498
    %vm2500 = vcmp.eq.f32.partialorder %v2432, inf
    %v2501 = vsel %vm2500, %v2432, %v2499
    %vm2502 = vcmp.eq.f32.partialorder %v2432, 0.0
    %v2503 = vand.u32 %v2432, 2147483648
    %v2504 = vsel %vm2502, %v2503, %v2501
    %v2505 = vrsqrt.pop %v2434
    %v2506 = vmul.f32 %v2434, %v2505
    %vm2507 = vcmp.eq.f32.partialorder %v2434, inf
    %v2508 = vsel %vm2507, %v2434, %v2506
    %vm2509 = vcmp.eq.f32.partialorder %v2434, 0.0
    %v2510 = vand.u32 %v2434, 2147483648
    %v2511 = vsel %vm2509, %v2510, %v2508
    %v2512 = vrsqrt.pop %v2436
    %v2513 = vmul.f32 %v2436, %v2512
    %vm2514 = vcmp.eq.f32.partialorder %v2436, inf
    %v2515 = vsel %vm2514, %v2436, %v2513
    %vm2516 = vcmp.eq.f32.partialorder %v2436, 0.0
    %v2517 = vand.u32 %v2436, 2147483648
    %v2518 = vsel %vm2516, %v2517, %v2515
    %v2519 = vrsqrt.pop %v2438
    %v2520 = vmul.f32 %v2438, %v2519
    %vm2521 = vcmp.eq.f32.partialorder %v2438, inf
    %v2522 = vsel %vm2521, %v2438, %v2520
    %vm2523 = vcmp.eq.f32.partialorder %v2438, 0.0
    %v2524 = vand.u32 %v2438, 2147483648
    %v2525 = vsel %vm2523, %v2524, %v2522
    %v2526 = vrsqrt.pop %v2440
    %v2527 = vmul.f32 %v2440, %v2526
    %vm2528 = vcmp.eq.f32.partialorder %v2440, inf
    %v2529 = vsel %vm2528, %v2440, %v2527
    %vm2530 = vcmp.eq.f32.partialorder %v2440, 0.0
    %v2531 = vand.u32 %v2440, 2147483648
    %v2532 = vsel %vm2530, %v2531, %v2529
    %v2533 = vrsqrt.pop %v2442
    %v2534 = vmul.f32 %v2442, %v2533
    %vm2535 = vcmp.eq.f32.partialorder %v2442, inf
    %v2536 = vsel %vm2535, %v2442, %v2534
    %vm2537 = vcmp.eq.f32.partialorder %v2442, 0.0
    %v2538 = vand.u32 %v2442, 2147483648
    %v2539 = vsel %vm2537, %v2538, %v2536
    %v2540 = vrsqrt.pop %v2444
    %v2541 = vmul.f32 %v2444, %v2540
    %vm2542 = vcmp.eq.f32.partialorder %v2444, inf
    %v2543 = vsel %vm2542, %v2444, %v2541
    %vm2544 = vcmp.eq.f32.partialorder %v2444, 0.0
    %v2545 = vand.u32 %v2444, 2147483648
    %v2546 = vsel %vm2544, %v2545, %v2543
    %v2547 = vrsqrt.pop %v2446
    %v2548 = vmul.f32 %v2446, %v2547
    %vm2549 = vcmp.eq.f32.partialorder %v2446, inf
    %v2550 = vsel %vm2549, %v2446, %v2548
    %vm2551 = vcmp.eq.f32.partialorder %v2446, 0.0
    %v2552 = vand.u32 %v2446, 2147483648
    %v2553 = vsel %vm2551, %v2552, %v2550
    %v2554 = vrsqrt.pop %v2448
    %v2555 = vmul.f32 %v2448, %v2554
    %vm2556 = vcmp.eq.f32.partialorder %v2448, inf
    %v2557 = vsel %vm2556, %v2448, %v2555
    %vm2558 = vcmp.eq.f32.partialorder %v2448, 0.0
    %v2559 = vand.u32 %v2448, 2147483648
    %v2560 = vsel %vm2558, %v2559, %v2557
    %v2561 = vmax.f32 %v2455, 1e-12
    %v2562 = vmax.f32 %v2462, 1e-12
    %v2563 = vmax.f32 %v2469, 1e-12
    %v2564 = vmax.f32 %v2476, 1e-12
    %v2565 = vmax.f32 %v2483, 1e-12
    %v2566 = vmax.f32 %v2490, 1e-12
    %v2567 = vmax.f32 %v2497, 1e-12
    %v2568 = vmax.f32 %v2504, 1e-12
    %v2569 = vmax.f32 %v2511, 1e-12
    %v2570 = vmax.f32 %v2518, 1e-12
    %v2571 = vmax.f32 %v2525, 1e-12
    %v2572 = vmax.f32 %v2532, 1e-12
    %v2573 = vmax.f32 %v2539, 1e-12
    %v2574 = vmax.f32 %v2546, 1e-12
    %v2575 = vmax.f32 %v2553, 1e-12
    %v2576 = vmax.f32 %v2560, 1e-12
    %v2577 = vrcp.pop %v2561
    %v2578 = vmul.f32 %v2339, %v2577
    %v2579 = vrcp.pop %v2562
    %v2580 = vmul.f32 %v2342, %v2579
    %v2581 = vrcp.pop %v2563
    %v2582 = vmul.f32 %v2347, %v2581
    %v2583 = vrcp.pop %v2564
    %v2584 = vmul.f32 %v2350, %v2583
    %v2585 = vrcp.pop %v2565
    %v2586 = vmul.f32 %v2355, %v2585
    %v2587 = vrcp.pop %v2566
    %v2588 = vmul.f32 %v2358, %v2587
    %v2589 = vrcp.pop %v2567
    %v2590 = vmul.f32 %v2363, %v2589
    %v2591 = vrcp.pop %v2568
    %v2592 = vmul.f32 %v2366, %v2591
    %v2593 = vrcp.pop %v2569
    %v2594 = vmul.f32 %v2371, %v2593
    %v2595 = vrcp.pop %v2570
    %v2596 = vmul.f32 %v2374, %v2595
    %v2597 = vrcp.pop %v2571
    %v2598 = vmul.f32 %v2379, %v2597
    %v2599 = vrcp.pop %v2572
    %v2600 = vmul.f32 %v2382, %v2599
    %v2601 = vrcp.pop %v2573
    %v2602 = vmul.f32 %v2387, %v2601
    %v2603 = vrcp.pop %v2574
    %v2604 = vmul.f32 %v2390, %v2603
    %v2605 = vrcp.pop %v2575
    %v2606 = vmul.f32 %v2395, %v2605
    %v2607 = vrcp.pop %v2576
    %v2608 = vmul.f32 %v2398, %v2607
    %v2609 = vpack.c.bf16 %v2580, %v2578
    %v2610 = vpack.c.bf16 %v2584, %v2582
    %v2611 = vpack.c.bf16 %v2588, %v2586
    %v2612 = vpack.c.bf16 %v2592, %v2590
    %v2613 = vpack.c.bf16 %v2596, %v2594
    %v2614 = vpack.c.bf16 %v2600, %v2598
    %v2615 = vpack.c.bf16 %v2604, %v2602
    %v2616 = vpack.c.bf16 %v2608, %v2606
    %v2625 = vunpack.c.l.b16 %v2609
    %v2626 = vunpack.c.h.b16 %v2609
    %v2627 = vunpack.c.l.b16 %v2610
    %v2628 = vunpack.c.h.b16 %v2610
    %v2629 = vunpack.c.l.b16 %v2611
    %v2630 = vunpack.c.h.b16 %v2611
    %v2631 = vunpack.c.l.b16 %v2612
    %v2632 = vunpack.c.h.b16 %v2612
    %v2633 = vunpack.c.l.b16 %v2613
    %v2634 = vunpack.c.h.b16 %v2613
    %v2635 = vunpack.c.l.b16 %v2614
    %v2636 = vunpack.c.h.b16 %v2614
    %v2637 = vunpack.c.l.b16 %v2615
    %v2638 = vunpack.c.h.b16 %v2615
    %v2639 = vunpack.c.l.b16 %v2616
    %v2640 = vunpack.c.h.b16 %v2616
    %v2641 = vpack.c.b16 %v2625, %v2625
    %v2642 = vpack.c.b16 %v2626, %v2626
    %v2643 = vpack.c.b16 %v2627, %v2627
    %v2644 = vpack.c.b16 %v2628, %v2628
    %v2645 = vpack.c.b16 %v2629, %v2629
    %v2646 = vpack.c.b16 %v2630, %v2630
    %v2647 = vpack.c.b16 %v2631, %v2631
    %v2648 = vpack.c.b16 %v2632, %v2632
    %v2649 = vpack.c.b16 %v2633, %v2633
    %v2650 = vpack.c.b16 %v2634, %v2634
    %v2651 = vpack.c.b16 %v2635, %v2635
    %v2652 = vpack.c.b16 %v2636, %v2636
    %v2653 = vpack.c.b16 %v2637, %v2637
    %v2654 = vpack.c.b16 %v2638, %v2638
    %v2655 = vpack.c.b16 %v2639, %v2639
    %v2656 = vpack.c.b16 %v2640, %v2640
    %2673 = vst [vmem:[#allocation8] sm:$0xf] %v2641
    %2674 = vst [vmem:[#allocation8 + $0x4] sm:$0xf] %v2642
    %2675 = vst [vmem:[#allocation8 + $0x8] sm:$0xf] %v2643
    %2676 = vst [vmem:[#allocation8 + $0xc] sm:$0xf] %v2644
    %2677 = vst [vmem:[#allocation8 + $0x10] sm:$0xf] %v2645
    %2678 = vst [vmem:[#allocation8 + $0x14] sm:$0xf] %v2646
    %2679 = vst [vmem:[#allocation8 + $0x18] sm:$0xf] %v2647
    %2680 = vst [vmem:[#allocation8 + $0x1c] sm:$0xf] %v2648
    %2681 = vst [vmem:[#allocation8 + $0x20] sm:$0xf] %v2649
    %2682 = vst [vmem:[#allocation8 + $0x24] sm:$0xf] %v2650
    %2683 = vst [vmem:[#allocation8 + $0x28] sm:$0xf] %v2651
    %2684 = vst [vmem:[#allocation8 + $0x2c] sm:$0xf] %v2652
    %2685 = vst [vmem:[#allocation8 + $0x30] sm:$0xf] %v2653
    %2686 = vst [vmem:[#allocation8 + $0x34] sm:$0xf] %v2654
    %2687 = vst [vmem:[#allocation8 + $0x38] sm:$0xf] %v2655
    %2688 = vst [vmem:[#allocation8 + $0x3c] sm:$0xf] %v2656
    // Predicated region
    $region26: #{tpu_custom_call.1} parent=1 // pred_check
      _
    $region27: #{tpu_custom_call.1} parent=1 // pred_check_branch
      %2690 = sbr.rel (0) target = $region29
    $region28: #{tpu_custom_call.1} parent=1 // pred_region
      %s2692 = ssub.s32 1024, 1024
      %2693 = vsyncadd [#allocation4], %s2692
      %s2694 = sshll.u32 [#allocation8], 4
      %s2695 = int_to_ptr.vmem [resolvable:$true] %s2694
      %2700 = dma.vmem_to_hbm [thread:$0]  %s2695, 1024, %s3, [#allocation4], 64, 64, 4
    $region29: #{tpu_custom_call.1} parent=1 // pred_fallthru
      _
    // Predicated region
    $region30: #{tpu_custom_call.1} parent=1 // pred_check
      _
    $region31: #{tpu_custom_call.1} parent=1 // pred_check_branch
      %2702 = sbr.rel (0) target = $region33
    $region32: #{tpu_custom_call.1} parent=1 // pred_region
      %2703 = dma.done [#allocation4], 1024
    $region33: #{tpu_custom_call.1} parent=1 // pred_fallthru
      _
    %2704 = vsyncpa [#allocation3], 1
    %2705 = vsyncpa [#allocation6], 1
    %2706 = vsyncpa [#allocation4], 1

</llo_original>
